<compile_context>
chip_gen: v7x
topology: tpu7x:2x2x1
jax: 0.10.0
libtpu: 0.0.40
codegen_flags: <defaults>
</compile_context>

<pallas_src>
import functools

import jax
import jax.numpy as jnp
from jax.experimental import pallas as pl
from jax.experimental.pallas import tpu as pltpu

KSIZE = 7
PAD = 3


def _spatial_attention_kernel(w_ref, x_ref, o_ref, *, H, W):
    # w_ref : SMEM f32[2*K*K]    flattened conv weight, order [in_ch, kh, kw]
    # x_ref : VMEM [Nb, C, H*W]  lane-dense input block
    # o_ref : VMEM [Nb, C, H*W]  lane-dense output block
    HW = H * W
    S = PAD * W + PAD                              # flat zero-pad per side

    x = x_ref[...].astype(jnp.float32)             # one cast in
    nb = x.shape[0]

    # Channel statistics, lane-dense (C sits on sublanes).
    avg = jnp.mean(x, axis=1)                      # (Nb, HW)
    mx = jnp.max(x, axis=1)                        # (Nb, HW)

    # Stack avg/max so each tap shifts ONE slab; pad once in the flat domain.
    maps = jnp.concatenate([avg, mx], axis=0)      # (2*Nb, HW)
    maps_p = jnp.pad(maps, ((0, 0), (S, S)))       # (2*Nb, HW + 2S)

    # Column index of every flat output position (for per-dw wrap masks) and
    # per-row selector (rows [0, Nb) = avg map, rows [Nb, 2Nb) = max map).
    col = jax.lax.broadcasted_iota(jnp.int32, (1, HW), 1) % W
    row_is_avg = jax.lax.broadcasted_iota(jnp.int32, (2 * nb, 1), 0) < nb

    # out[h, w] = sum_{dh,dw} w[dh,dw] * padded_map[h+dh, w+dw]
    # In flat coords the padded read index is j + dh*W + dw; row overflow lands
    # in the zero padding automatically, column wrap is killed by the dw mask.
    accs = jnp.zeros((2 * nb, HW), jnp.float32)
    for dw in range(KSIZE):
        inner = jnp.zeros((2 * nb, HW), jnp.float32)
        for dh in range(KSIZE):
            st = dh * W + dw                       # static lane offset of this tap
            wa = w_ref[dh * KSIZE + dw]                      # tap weight, avg map
            wm = w_ref[KSIZE * KSIZE + dh * KSIZE + dw]      # tap weight, max map
            wv = jnp.where(row_is_avg, wa, wm)     # (2*Nb, 1) per-row tap weight
            inner = inner + wv * maps_p[:, st:st + HW]
        lo = max(0, PAD - dw)
        hi = min(W, W + PAD - dw)
        if lo == 0 and hi == W:                    # dw == PAD: no column wrap
            accs = accs + inner
        else:
            cmask = ((col >= lo) & (col < hi)).astype(jnp.float32)
            accs = accs + cmask * inner

    acc = accs[:nb] + accs[nb:]                    # sum avg- and max-branches
    att = jax.nn.sigmoid(acc)                      # (Nb, HW)

    # Lane-dense elementwise apply + single cast out (unmasked vst).
    o_ref[...] = (x * att[:, None, :]).astype(o_ref.dtype)


def _pick_batch_block(n, bytes_per_item, budget_bytes=2 << 20):
    """Largest divisor of n whose block fits the budget, keeping >= 2 grid steps
    when possible so both v7x TensorCores get work."""
    nb = max(1, min(n, budget_bytes // max(bytes_per_item, 1)))
    if n >= 2:
        nb = max(1, min(nb, n // 2))
    while n % nb:
        nb -= 1
    return nb


def spatial_attention(x, conv_w):
    """x: [N, C, H, W]; conv_w: [1, 2, K, K] (OIHW, Conv2d(2, 1, 7, bias=False))."""
    N, C, H, W = x.shape
    HW = H * W
    itemsize = x.dtype.itemsize

    # Lane-dense view of the NCHW tensor (contiguous reshape: free).
    x_flat = x.reshape(N, C, HW)
    w_flat = conv_w.reshape(-1).astype(jnp.float32)        # (2*K*K,) -> SMEM

    nb = _pick_batch_block(N, C * HW * itemsize)
    grid = (N // nb,)

    block_bytes = nb * C * HW * itemsize
    # in + out double-buffered, plus f32 temporaries / conv scratch headroom.
    # TODO(synk): for very large C*H*W blocks (v7x's 64 MiB VMEM) switch to a
    # C-tiled two-pass scheme (running sum/max to build att, then re-stream x).
    vmem_limit = int(min(max(6 * block_bytes + (16 << 20), 32 << 20), 64 << 20))

    cost = pl.CostEstimate(
        flops=int(3 * N * C * HW + 4 * KSIZE * KSIZE * N * HW),
        transcendentals=int(N * HW),
        bytes_accessed=int(2 * N * C * HW * itemsize + w_flat.size * 4),
    )

    kernel = functools.partial(_spatial_attention_kernel, H=H, W=W)

    out_flat = pl.pallas_call(
        kernel,
        out_shape=jax.ShapeDtypeStruct((N, C, HW), x.dtype),
        grid_spec=pltpu.PrefetchScalarGridSpec(
            num_scalar_prefetch=1,                          # conv weight -> SMEM
            grid=grid,
            in_specs=[pl.BlockSpec((nb, C, HW), lambda n, w: (n, 0, 0))],
            out_specs=pl.BlockSpec((nb, C, HW), lambda n, w: (n, 0, 0)),
        ),
        compiler_params=pltpu.CompilerParams(
            dimension_semantics=("parallel",),
            vmem_limit_bytes=vmem_limit,
        ),
        cost_estimate=cost,
    )(w_flat, x_flat)

    return out_flat.reshape(N, C, H, W)


if __name__ == "__main__":
    key = jax.random.PRNGKey(0)
    kx, kw = jax.random.split(key)

    N, C, H, W = 2, 4, 16, 16
    x = jax.random.normal(kx, (N, C, H, W), dtype=jnp.float32)
    # Deterministic synthetic conv weight (Conv2d(2, 1, 7, bias=False) shape).
    conv_w = jax.random.normal(kw, (1, 2, KSIZE, KSIZE), dtype=jnp.float32) * 0.1

    out = jax.block_until_ready(spatial_attention(x, conv_w))

    # Pure-JAX reference for a sanity check.
    avg = jnp.mean(x, axis=1, keepdims=True)
    mx = jnp.max(x, axis=1, keepdims=True)
    cat = jnp.concatenate([avg, mx], axis=1)
    conv = jax.lax.conv_general_dilated(
        cat, conv_w, window_strides=(1, 1),
        padding=[(PAD, PAD), (PAD, PAD)],
        dimension_numbers=("NCHW", "OIHW", "NCHW"))
    ref = x * jax.nn.sigmoid(conv)

    assert out.shape == x.shape and out.dtype == x.dtype
    assert jnp.allclose(out, ref, atol=2e-5, rtol=2e-5)
    print("KERNEL_OK")
</pallas_src>

<mosaic_0001>
module attributes {stable_mosaic.version = 11 : i64} {
  func.func @_spatial_attention_kernel(%arg0: i32, %arg1: memref<98xf32, #tpu.memory_space<smem>>, %arg2: memref<1x4x256xf32, #tpu.memory_space<vmem>>, %arg3: memref<1x4x256xf32, #tpu.memory_space<vmem>>) attributes {dimension_semantics = [#tpu.dimension_semantics<parallel>], iteration_bounds = array<i64: 2>, scalar_prefetch = 1 : i64, scratch_operands = 0 : i64, tpu.core_type = #tpu.core_type<tc>, window_params = [{transform_indices = @transform_0, window_bounds = array<i64: 1, 4, 256>}, {transform_indices = @transform_1, window_bounds = array<i64: 1, 4, 256>}]} {
    %c0 = arith.constant 0 : index
    %c0_0 = arith.constant 0 : index
    %c0_1 = arith.constant 0 : index
    %0 = vector.load %arg2[%c0, %c0_0, %c0_1] : memref<1x4x256xf32, #tpu.memory_space<vmem>>, vector<1x4x256xf32>
    %cst = arith.constant dense<0.000000e+00> : vector<1x256xf32>
    %1 = vector.multi_reduction <add>, %0, %cst [1] : vector<1x4x256xf32> to vector<1x256xf32>
    %cst_2 = arith.constant 4.000000e+00 : f32
    %2 = vector.broadcast %cst_2 : f32 to vector<1x256xf32>
    %3 = arith.divf %1, %2 : vector<1x256xf32>
    %cst_3 = arith.constant dense<0xFF800000> : vector<1x256xf32>
    %4 = vector.multi_reduction <maximumf>, %0, %cst_3 [1] : vector<1x4x256xf32> to vector<1x256xf32>
    %5 = tpu.concatenate %3, %4 in 0 : vector<1x256xf32>, vector<1x256xf32> -> vector<2x256xf32>
    %c0_i32 = arith.constant 0 : i32
    %6 = arith.sitofp %c0_i32 : i32 to f32
    %7 = vector.broadcast %6 : f32 to vector<2x51xf32>
    %8 = tpu.concatenate %7, %5 in 1 : vector<2x51xf32>, vector<2x256xf32> -> vector<2x307xf32>
    %9 = vector.broadcast %6 : f32 to vector<2x51xf32>
    %10 = tpu.concatenate %8, %9 in 1 : vector<2x307xf32>, vector<2x51xf32> -> vector<2x358xf32>
    %11 = tpu.iota {dimensions = array<i32: 1>} : vector<1x256xi32>
    %c16_i32 = arith.constant 16 : i32
    %c0_i32_4 = arith.constant 0 : i32
    %12 = arith.cmpi eq, %c16_i32, %c0_i32_4 : i32
    %c1_i32 = arith.constant 1 : i32
    %13 = arith.select %12, %c1_i32, %c16_i32 : i32
    %14 = vector.broadcast %13 : i32 to vector<1x256xi32>
    %15 = arith.remsi %11, %14 : vector<1x256xi32>
    %c0_i32_5 = arith.constant 0 : i32
    %16 = vector.broadcast %c0_i32_5 : i32 to vector<1x256xi32>
    %17 = arith.cmpi ne, %15, %16 : vector<1x256xi32>
    %c0_i32_6 = arith.constant 0 : i32
    %18 = vector.broadcast %c0_i32_6 : i32 to vector<1x256xi32>
    %19 = arith.cmpi slt, %15, %18 : vector<1x256xi32>
    %c0_i32_7 = arith.constant 0 : i32
    %20 = arith.cmpi slt, %13, %c0_i32_7 : i32
    %21 = vector.broadcast %20 : i1 to vector<1x256xi1>
    %22 = vector.broadcast %21 : vector<1x256xi1> to vector<1x256xi1>
    %23 = arith.xori %19, %22 : vector<1x256xi1>
    %24 = arith.andi %23, %17 : vector<1x256xi1>
    %25 = vector.broadcast %13 : i32 to vector<1x256xi32>
    %26 = arith.addi %15, %25 : vector<1x256xi32>
    %27 = arith.select %24, %26, %15 : vector<1x256xi1>, vector<1x256xi32>
    %28 = tpu.iota {dimensions = array<i32: 0>} : vector<2x1xi32>
    %c1_i32_8 = arith.constant 1 : i32
    %29 = vector.broadcast %c1_i32_8 : i32 to vector<2x1xi32>
    %30 = arith.cmpi slt, %28, %29 : vector<2x1xi32>
    %cst_9 = arith.constant 0.000000e+00 : f32
    %31 = vector.broadcast %cst_9 : f32 to vector<2x256xf32>
    %cst_10 = arith.constant 0.000000e+00 : f32
    %32 = vector.broadcast %cst_10 : f32 to vector<2x256xf32>
    %c0_11 = arith.constant 0 : index
    %33 = memref.load %arg1[%c0_11] : memref<98xf32, #tpu.memory_space<smem>>
    %c49 = arith.constant 49 : index
    %34 = memref.load %arg1[%c49] : memref<98xf32, #tpu.memory_space<smem>>
    %35 = vector.broadcast %33 : f32 to vector<2x1xf32>
    %36 = vector.broadcast %34 : f32 to vector<2x1xf32>
    %37 = arith.select %30, %35, %36 : vector<2x1xi1>, vector<2x1xf32>
    %38 = vector.extract_strided_slice %10 {offsets = [0, 0], sizes = [2, 256], strides = [1, 1]} : vector<2x358xf32> to vector<2x256xf32>
    %39 = vector.broadcast %37 : vector<2x1xf32> to vector<2x256xf32>
    %40 = arith.mulf %39, %38 : vector<2x256xf32>
    %41 = arith.addf %32, %40 : vector<2x256xf32>
    %c7 = arith.constant 7 : index
    %42 = memref.load %arg1[%c7] : memref<98xf32, #tpu.memory_space<smem>>
    %c56 = arith.constant 56 : index
    %43 = memref.load %arg1[%c56] : memref<98xf32, #tpu.memory_space<smem>>
    %44 = vector.broadcast %42 : f32 to vector<2x1xf32>
    %45 = vector.broadcast %43 : f32 to vector<2x1xf32>
    %46 = arith.select %30, %44, %45 : vector<2x1xi1>, vector<2x1xf32>
    %47 = vector.extract_strided_slice %10 {offsets = [0, 16], sizes = [2, 256], strides = [1, 1]} : vector<2x358xf32> to vector<2x256xf32>
    %48 = vector.broadcast %46 : vector<2x1xf32> to vector<2x256xf32>
    %49 = arith.mulf %48, %47 : vector<2x256xf32>
    %50 = arith.addf %41, %49 : vector<2x256xf32>
    %c14 = arith.constant 14 : index
    %51 = memref.load %arg1[%c14] : memref<98xf32, #tpu.memory_space<smem>>
    %c63 = arith.constant 63 : index
    %52 = memref.load %arg1[%c63] : memref<98xf32, #tpu.memory_space<smem>>
    %53 = vector.broadcast %51 : f32 to vector<2x1xf32>
    %54 = vector.broadcast %52 : f32 to vector<2x1xf32>
    %55 = arith.select %30, %53, %54 : vector<2x1xi1>, vector<2x1xf32>
    %56 = vector.extract_strided_slice %10 {offsets = [0, 32], sizes = [2, 256], strides = [1, 1]} : vector<2x358xf32> to vector<2x256xf32>
    %57 = vector.broadcast %55 : vector<2x1xf32> to vector<2x256xf32>
    %58 = arith.mulf %57, %56 : vector<2x256xf32>
    %59 = arith.addf %50, %58 : vector<2x256xf32>
    %c21 = arith.constant 21 : index
    %60 = memref.load %arg1[%c21] : memref<98xf32, #tpu.memory_space<smem>>
    %c70 = arith.constant 70 : index
    %61 = memref.load %arg1[%c70] : memref<98xf32, #tpu.memory_space<smem>>
    %62 = vector.broadcast %60 : f32 to vector<2x1xf32>
    %63 = vector.broadcast %61 : f32 to vector<2x1xf32>
    %64 = arith.select %30, %62, %63 : vector<2x1xi1>, vector<2x1xf32>
    %65 = vector.extract_strided_slice %10 {offsets = [0, 48], sizes = [2, 256], strides = [1, 1]} : vector<2x358xf32> to vector<2x256xf32>
    %66 = vector.broadcast %64 : vector<2x1xf32> to vector<2x256xf32>
    %67 = arith.mulf %66, %65 : vector<2x256xf32>
    %68 = arith.addf %59, %67 : vector<2x256xf32>
    %c28 = arith.constant 28 : index
    %69 = memref.load %arg1[%c28] : memref<98xf32, #tpu.memory_space<smem>>
    %c77 = arith.constant 77 : index
    %70 = memref.load %arg1[%c77] : memref<98xf32, #tpu.memory_space<smem>>
    %71 = vector.broadcast %69 : f32 to vector<2x1xf32>
    %72 = vector.broadcast %70 : f32 to vector<2x1xf32>
    %73 = arith.select %30, %71, %72 : vector<2x1xi1>, vector<2x1xf32>
    %74 = vector.extract_strided_slice %10 {offsets = [0, 64], sizes = [2, 256], strides = [1, 1]} : vector<2x358xf32> to vector<2x256xf32>
    %75 = vector.broadcast %73 : vector<2x1xf32> to vector<2x256xf32>
    %76 = arith.mulf %75, %74 : vector<2x256xf32>
    %77 = arith.addf %68, %76 : vector<2x256xf32>
    %c35 = arith.constant 35 : index
    %78 = memref.load %arg1[%c35] : memref<98xf32, #tpu.memory_space<smem>>
    %c84 = arith.constant 84 : index
    %79 = memref.load %arg1[%c84] : memref<98xf32, #tpu.memory_space<smem>>
    %80 = vector.broadcast %78 : f32 to vector<2x1xf32>
    %81 = vector.broadcast %79 : f32 to vector<2x1xf32>
    %82 = arith.select %30, %80, %81 : vector<2x1xi1>, vector<2x1xf32>
    %83 = vector.extract_strided_slice %10 {offsets = [0, 80], sizes = [2, 256], strides = [1, 1]} : vector<2x358xf32> to vector<2x256xf32>
    %84 = vector.broadcast %82 : vector<2x1xf32> to vector<2x256xf32>
    %85 = arith.mulf %84, %83 : vector<2x256xf32>
    %86 = arith.addf %77, %85 : vector<2x256xf32>
    %c42 = arith.constant 42 : index
    %87 = memref.load %arg1[%c42] : memref<98xf32, #tpu.memory_space<smem>>
    %c91 = arith.constant 91 : index
    %88 = memref.load %arg1[%c91] : memref<98xf32, #tpu.memory_space<smem>>
    %89 = vector.broadcast %87 : f32 to vector<2x1xf32>
    %90 = vector.broadcast %88 : f32 to vector<2x1xf32>
    %91 = arith.select %30, %89, %90 : vector<2x1xi1>, vector<2x1xf32>
    %92 = vector.extract_strided_slice %10 {offsets = [0, 96], sizes = [2, 256], strides = [1, 1]} : vector<2x358xf32> to vector<2x256xf32>
    %93 = vector.broadcast %91 : vector<2x1xf32> to vector<2x256xf32>
    %94 = arith.mulf %93, %92 : vector<2x256xf32>
    %95 = arith.addf %86, %94 : vector<2x256xf32>
    %c3_i32 = arith.constant 3 : i32
    %96 = vector.broadcast %c3_i32 : i32 to vector<1x256xi32>
    %97 = arith.cmpi sge, %27, %96 : vector<1x256xi32>
    %c16_i32_12 = arith.constant 16 : i32
    %98 = vector.broadcast %c16_i32_12 : i32 to vector<1x256xi32>
    %99 = arith.cmpi slt, %27, %98 : vector<1x256xi32>
    %100 = arith.andi %97, %99 : vector<1x256xi1>
    %101 = arith.extui %100 : vector<1x256xi1> to vector<1x256xi32>
    %102 = arith.sitofp %101 : vector<1x256xi32> to vector<1x256xf32>
    %103 = vector.broadcast %102 : vector<1x256xf32> to vector<2x256xf32>
    %104 = arith.mulf %103, %95 : vector<2x256xf32>
    %105 = arith.addf %31, %104 : vector<2x256xf32>
    %cst_13 = arith.constant 0.000000e+00 : f32
    %106 = vector.broadcast %cst_13 : f32 to vector<2x256xf32>
    %c1 = arith.constant 1 : index
    %107 = memref.load %arg1[%c1] : memref<98xf32, #tpu.memory_space<smem>>
    %c50 = arith.constant 50 : index
    %108 = memref.load %arg1[%c50] : memref<98xf32, #tpu.memory_space<smem>>
    %109 = vector.broadcast %107 : f32 to vector<2x1xf32>
    %110 = vector.broadcast %108 : f32 to vector<2x1xf32>
    %111 = arith.select %30, %109, %110 : vector<2x1xi1>, vector<2x1xf32>
    %112 = vector.extract_strided_slice %10 {offsets = [0, 1], sizes = [2, 256], strides = [1, 1]} : vector<2x358xf32> to vector<2x256xf32>
    %113 = vector.broadcast %111 : vector<2x1xf32> to vector<2x256xf32>
    %114 = arith.mulf %113, %112 : vector<2x256xf32>
    %115 = arith.addf %106, %114 : vector<2x256xf32>
    %c8 = arith.constant 8 : index
    %116 = memref.load %arg1[%c8] : memref<98xf32, #tpu.memory_space<smem>>
    %c57 = arith.constant 57 : index
    %117 = memref.load %arg1[%c57] : memref<98xf32, #tpu.memory_space<smem>>
    %118 = vector.broadcast %116 : f32 to vector<2x1xf32>
    %119 = vector.broadcast %117 : f32 to vector<2x1xf32>
    %120 = arith.select %30, %118, %119 : vector<2x1xi1>, vector<2x1xf32>
    %121 = vector.extract_strided_slice %10 {offsets = [0, 17], sizes = [2, 256], strides = [1, 1]} : vector<2x358xf32> to vector<2x256xf32>
    %122 = vector.broadcast %120 : vector<2x1xf32> to vector<2x256xf32>
    %123 = arith.mulf %122, %121 : vector<2x256xf32>
    %124 = arith.addf %115, %123 : vector<2x256xf32>
    %c15 = arith.constant 15 : index
    %125 = memref.load %arg1[%c15] : memref<98xf32, #tpu.memory_space<smem>>
    %c64 = arith.constant 64 : index
    %126 = memref.load %arg1[%c64] : memref<98xf32, #tpu.memory_space<smem>>
    %127 = vector.broadcast %125 : f32 to vector<2x1xf32>
    %128 = vector.broadcast %126 : f32 to vector<2x1xf32>
    %129 = arith.select %30, %127, %128 : vector<2x1xi1>, vector<2x1xf32>
    %130 = vector.extract_strided_slice %10 {offsets = [0, 33], sizes = [2, 256], strides = [1, 1]} : vector<2x358xf32> to vector<2x256xf32>
    %131 = vector.broadcast %129 : vector<2x1xf32> to vector<2x256xf32>
    %132 = arith.mulf %131, %130 : vector<2x256xf32>
    %133 = arith.addf %124, %132 : vector<2x256xf32>
    %c22 = arith.constant 22 : index
    %134 = memref.load %arg1[%c22] : memref<98xf32, #tpu.memory_space<smem>>
    %c71 = arith.constant 71 : index
    %135 = memref.load %arg1[%c71] : memref<98xf32, #tpu.memory_space<smem>>
    %136 = vector.broadcast %134 : f32 to vector<2x1xf32>
    %137 = vector.broadcast %135 : f32 to vector<2x1xf32>
    %138 = arith.select %30, %136, %137 : vector<2x1xi1>, vector<2x1xf32>
    %139 = vector.extract_strided_slice %10 {offsets = [0, 49], sizes = [2, 256], strides = [1, 1]} : vector<2x358xf32> to vector<2x256xf32>
    %140 = vector.broadcast %138 : vector<2x1xf32> to vector<2x256xf32>
    %141 = arith.mulf %140, %139 : vector<2x256xf32>
    %142 = arith.addf %133, %141 : vector<2x256xf32>
    %c29 = arith.constant 29 : index
    %143 = memref.load %arg1[%c29] : memref<98xf32, #tpu.memory_space<smem>>
    %c78 = arith.constant 78 : index
    %144 = memref.load %arg1[%c78] : memref<98xf32, #tpu.memory_space<smem>>
    %145 = vector.broadcast %143 : f32 to vector<2x1xf32>
    %146 = vector.broadcast %144 : f32 to vector<2x1xf32>
    %147 = arith.select %30, %145, %146 : vector<2x1xi1>, vector<2x1xf32>
    %148 = vector.extract_strided_slice %10 {offsets = [0, 65], sizes = [2, 256], strides = [1, 1]} : vector<2x358xf32> to vector<2x256xf32>
    %149 = vector.broadcast %147 : vector<2x1xf32> to vector<2x256xf32>
    %150 = arith.mulf %149, %148 : vector<2x256xf32>
    %151 = arith.addf %142, %150 : vector<2x256xf32>
    %c36 = arith.constant 36 : index
    %152 = memref.load %arg1[%c36] : memref<98xf32, #tpu.memory_space<smem>>
    %c85 = arith.constant 85 : index
    %153 = memref.load %arg1[%c85] : memref<98xf32, #tpu.memory_space<smem>>
    %154 = vector.broadcast %152 : f32 to vector<2x1xf32>
    %155 = vector.broadcast %153 : f32 to vector<2x1xf32>
    %156 = arith.select %30, %154, %155 : vector<2x1xi1>, vector<2x1xf32>
    %157 = vector.extract_strided_slice %10 {offsets = [0, 81], sizes = [2, 256], strides = [1, 1]} : vector<2x358xf32> to vector<2x256xf32>
    %158 = vector.broadcast %156 : vector<2x1xf32> to vector<2x256xf32>
    %159 = arith.mulf %158, %157 : vector<2x256xf32>
    %160 = arith.addf %151, %159 : vector<2x256xf32>
    %c43 = arith.constant 43 : index
    %161 = memref.load %arg1[%c43] : memref<98xf32, #tpu.memory_space<smem>>
    %c92 = arith.constant 92 : index
    %162 = memref.load %arg1[%c92] : memref<98xf32, #tpu.memory_space<smem>>
    %163 = vector.broadcast %161 : f32 to vector<2x1xf32>
    %164 = vector.broadcast %162 : f32 to vector<2x1xf32>
    %165 = arith.select %30, %163, %164 : vector<2x1xi1>, vector<2x1xf32>
    %166 = vector.extract_strided_slice %10 {offsets = [0, 97], sizes = [2, 256], strides = [1, 1]} : vector<2x358xf32> to vector<2x256xf32>
    %167 = vector.broadcast %165 : vector<2x1xf32> to vector<2x256xf32>
    %168 = arith.mulf %167, %166 : vector<2x256xf32>
    %169 = arith.addf %160, %168 : vector<2x256xf32>
    %c2_i32 = arith.constant 2 : i32
    %170 = vector.broadcast %c2_i32 : i32 to vector<1x256xi32>
    %171 = arith.cmpi sge, %27, %170 : vector<1x256xi32>
    %c16_i32_14 = arith.constant 16 : i32
    %172 = vector.broadcast %c16_i32_14 : i32 to vector<1x256xi32>
    %173 = arith.cmpi slt, %27, %172 : vector<1x256xi32>
    %174 = arith.andi %171, %173 : vector<1x256xi1>
    %175 = arith.extui %174 : vector<1x256xi1> to vector<1x256xi32>
    %176 = arith.sitofp %175 : vector<1x256xi32> to vector<1x256xf32>
    %177 = vector.broadcast %176 : vector<1x256xf32> to vector<2x256xf32>
    %178 = arith.mulf %177, %169 : vector<2x256xf32>
    %179 = arith.addf %105, %178 : vector<2x256xf32>
    %cst_15 = arith.constant 0.000000e+00 : f32
    %180 = vector.broadcast %cst_15 : f32 to vector<2x256xf32>
    %c2 = arith.constant 2 : index
    %181 = memref.load %arg1[%c2] : memref<98xf32, #tpu.memory_space<smem>>
    %c51 = arith.constant 51 : index
    %182 = memref.load %arg1[%c51] : memref<98xf32, #tpu.memory_space<smem>>
    %183 = vector.broadcast %181 : f32 to vector<2x1xf32>
    %184 = vector.broadcast %182 : f32 to vector<2x1xf32>
    %185 = arith.select %30, %183, %184 : vector<2x1xi1>, vector<2x1xf32>
    %186 = vector.extract_strided_slice %10 {offsets = [0, 2], sizes = [2, 256], strides = [1, 1]} : vector<2x358xf32> to vector<2x256xf32>
    %187 = vector.broadcast %185 : vector<2x1xf32> to vector<2x256xf32>
    %188 = arith.mulf %187, %186 : vector<2x256xf32>
    %189 = arith.addf %180, %188 : vector<2x256xf32>
    %c9 = arith.constant 9 : index
    %190 = memref.load %arg1[%c9] : memref<98xf32, #tpu.memory_space<smem>>
    %c58 = arith.constant 58 : index
    %191 = memref.load %arg1[%c58] : memref<98xf32, #tpu.memory_space<smem>>
    %192 = vector.broadcast %190 : f32 to vector<2x1xf32>
    %193 = vector.broadcast %191 : f32 to vector<2x1xf32>
    %194 = arith.select %30, %192, %193 : vector<2x1xi1>, vector<2x1xf32>
    %195 = vector.extract_strided_slice %10 {offsets = [0, 18], sizes = [2, 256], strides = [1, 1]} : vector<2x358xf32> to vector<2x256xf32>
    %196 = vector.broadcast %194 : vector<2x1xf32> to vector<2x256xf32>
    %197 = arith.mulf %196, %195 : vector<2x256xf32>
    %198 = arith.addf %189, %197 : vector<2x256xf32>
    %c16 = arith.constant 16 : index
    %199 = memref.load %arg1[%c16] : memref<98xf32, #tpu.memory_space<smem>>
    %c65 = arith.constant 65 : index
    %200 = memref.load %arg1[%c65] : memref<98xf32, #tpu.memory_space<smem>>
    %201 = vector.broadcast %199 : f32 to vector<2x1xf32>
    %202 = vector.broadcast %200 : f32 to vector<2x1xf32>
    %203 = arith.select %30, %201, %202 : vector<2x1xi1>, vector<2x1xf32>
    %204 = vector.extract_strided_slice %10 {offsets = [0, 34], sizes = [2, 256], strides = [1, 1]} : vector<2x358xf32> to vector<2x256xf32>
    %205 = vector.broadcast %203 : vector<2x1xf32> to vector<2x256xf32>
    %206 = arith.mulf %205, %204 : vector<2x256xf32>
    %207 = arith.addf %198, %206 : vector<2x256xf32>
    %c23 = arith.constant 23 : index
    %208 = memref.load %arg1[%c23] : memref<98xf32, #tpu.memory_space<smem>>
    %c72 = arith.constant 72 : index
    %209 = memref.load %arg1[%c72] : memref<98xf32, #tpu.memory_space<smem>>
    %210 = vector.broadcast %208 : f32 to vector<2x1xf32>
    %211 = vector.broadcast %209 : f32 to vector<2x1xf32>
    %212 = arith.select %30, %210, %211 : vector<2x1xi1>, vector<2x1xf32>
    %213 = vector.extract_strided_slice %10 {offsets = [0, 50], sizes = [2, 256], strides = [1, 1]} : vector<2x358xf32> to vector<2x256xf32>
    %214 = vector.broadcast %212 : vector<2x1xf32> to vector<2x256xf32>
    %215 = arith.mulf %214, %213 : vector<2x256xf32>
    %216 = arith.addf %207, %215 : vector<2x256xf32>
    %c30 = arith.constant 30 : index
    %217 = memref.load %arg1[%c30] : memref<98xf32, #tpu.memory_space<smem>>
    %c79 = arith.constant 79 : index
    %218 = memref.load %arg1[%c79] : memref<98xf32, #tpu.memory_space<smem>>
    %219 = vector.broadcast %217 : f32 to vector<2x1xf32>
    %220 = vector.broadcast %218 : f32 to vector<2x1xf32>
    %221 = arith.select %30, %219, %220 : vector<2x1xi1>, vector<2x1xf32>
    %222 = vector.extract_strided_slice %10 {offsets = [0, 66], sizes = [2, 256], strides = [1, 1]} : vector<2x358xf32> to vector<2x256xf32>
    %223 = vector.broadcast %221 : vector<2x1xf32> to vector<2x256xf32>
    %224 = arith.mulf %223, %222 : vector<2x256xf32>
    %225 = arith.addf %216, %224 : vector<2x256xf32>
    %c37 = arith.constant 37 : index
    %226 = memref.load %arg1[%c37] : memref<98xf32, #tpu.memory_space<smem>>
    %c86 = arith.constant 86 : index
    %227 = memref.load %arg1[%c86] : memref<98xf32, #tpu.memory_space<smem>>
    %228 = vector.broadcast %226 : f32 to vector<2x1xf32>
    %229 = vector.broadcast %227 : f32 to vector<2x1xf32>
    %230 = arith.select %30, %228, %229 : vector<2x1xi1>, vector<2x1xf32>
    %231 = vector.extract_strided_slice %10 {offsets = [0, 82], sizes = [2, 256], strides = [1, 1]} : vector<2x358xf32> to vector<2x256xf32>
    %232 = vector.broadcast %230 : vector<2x1xf32> to vector<2x256xf32>
    %233 = arith.mulf %232, %231 : vector<2x256xf32>
    %234 = arith.addf %225, %233 : vector<2x256xf32>
    %c44 = arith.constant 44 : index
    %235 = memref.load %arg1[%c44] : memref<98xf32, #tpu.memory_space<smem>>
    %c93 = arith.constant 93 : index
    %236 = memref.load %arg1[%c93] : memref<98xf32, #tpu.memory_space<smem>>
    %237 = vector.broadcast %235 : f32 to vector<2x1xf32>
    %238 = vector.broadcast %236 : f32 to vector<2x1xf32>
    %239 = arith.select %30, %237, %238 : vector<2x1xi1>, vector<2x1xf32>
    %240 = vector.extract_strided_slice %10 {offsets = [0, 98], sizes = [2, 256], strides = [1, 1]} : vector<2x358xf32> to vector<2x256xf32>
    %241 = vector.broadcast %239 : vector<2x1xf32> to vector<2x256xf32>
    %242 = arith.mulf %241, %240 : vector<2x256xf32>
    %243 = arith.addf %234, %242 : vector<2x256xf32>
    %c1_i32_16 = arith.constant 1 : i32
    %244 = vector.broadcast %c1_i32_16 : i32 to vector<1x256xi32>
    %245 = arith.cmpi sge, %27, %244 : vector<1x256xi32>
    %c16_i32_17 = arith.constant 16 : i32
    %246 = vector.broadcast %c16_i32_17 : i32 to vector<1x256xi32>
    %247 = arith.cmpi slt, %27, %246 : vector<1x256xi32>
    %248 = arith.andi %245, %247 : vector<1x256xi1>
    %249 = arith.extui %248 : vector<1x256xi1> to vector<1x256xi32>
    %250 = arith.sitofp %249 : vector<1x256xi32> to vector<1x256xf32>
    %251 = vector.broadcast %250 : vector<1x256xf32> to vector<2x256xf32>
    %252 = arith.mulf %251, %243 : vector<2x256xf32>
    %253 = arith.addf %179, %252 : vector<2x256xf32>
    %cst_18 = arith.constant 0.000000e+00 : f32
    %254 = vector.broadcast %cst_18 : f32 to vector<2x256xf32>
    %c3 = arith.constant 3 : index
    %255 = memref.load %arg1[%c3] : memref<98xf32, #tpu.memory_space<smem>>
    %c52 = arith.constant 52 : index
    %256 = memref.load %arg1[%c52] : memref<98xf32, #tpu.memory_space<smem>>
    %257 = vector.broadcast %255 : f32 to vector<2x1xf32>
    %258 = vector.broadcast %256 : f32 to vector<2x1xf32>
    %259 = arith.select %30, %257, %258 : vector<2x1xi1>, vector<2x1xf32>
    %260 = vector.extract_strided_slice %10 {offsets = [0, 3], sizes = [2, 256], strides = [1, 1]} : vector<2x358xf32> to vector<2x256xf32>
    %261 = vector.broadcast %259 : vector<2x1xf32> to vector<2x256xf32>
    %262 = arith.mulf %261, %260 : vector<2x256xf32>
    %263 = arith.addf %254, %262 : vector<2x256xf32>
    %c10 = arith.constant 10 : index
    %264 = memref.load %arg1[%c10] : memref<98xf32, #tpu.memory_space<smem>>
    %c59 = arith.constant 59 : index
    %265 = memref.load %arg1[%c59] : memref<98xf32, #tpu.memory_space<smem>>
    %266 = vector.broadcast %264 : f32 to vector<2x1xf32>
    %267 = vector.broadcast %265 : f32 to vector<2x1xf32>
    %268 = arith.select %30, %266, %267 : vector<2x1xi1>, vector<2x1xf32>
    %269 = vector.extract_strided_slice %10 {offsets = [0, 19], sizes = [2, 256], strides = [1, 1]} : vector<2x358xf32> to vector<2x256xf32>
    %270 = vector.broadcast %268 : vector<2x1xf32> to vector<2x256xf32>
    %271 = arith.mulf %270, %269 : vector<2x256xf32>
    %272 = arith.addf %263, %271 : vector<2x256xf32>
    %c17 = arith.constant 17 : index
    %273 = memref.load %arg1[%c17] : memref<98xf32, #tpu.memory_space<smem>>
    %c66 = arith.constant 66 : index
    %274 = memref.load %arg1[%c66] : memref<98xf32, #tpu.memory_space<smem>>
    %275 = vector.broadcast %273 : f32 to vector<2x1xf32>
    %276 = vector.broadcast %274 : f32 to vector<2x1xf32>
    %277 = arith.select %30, %275, %276 : vector<2x1xi1>, vector<2x1xf32>
    %278 = vector.extract_strided_slice %10 {offsets = [0, 35], sizes = [2, 256], strides = [1, 1]} : vector<2x358xf32> to vector<2x256xf32>
    %279 = vector.broadcast %277 : vector<2x1xf32> to vector<2x256xf32>
    %280 = arith.mulf %279, %278 : vector<2x256xf32>
    %281 = arith.addf %272, %280 : vector<2x256xf32>
    %c24 = arith.constant 24 : index
    %282 = memref.load %arg1[%c24] : memref<98xf32, #tpu.memory_space<smem>>
    %c73 = arith.constant 73 : index
    %283 = memref.load %arg1[%c73] : memref<98xf32, #tpu.memory_space<smem>>
    %284 = vector.broadcast %282 : f32 to vector<2x1xf32>
    %285 = vector.broadcast %283 : f32 to vector<2x1xf32>
    %286 = arith.select %30, %284, %285 : vector<2x1xi1>, vector<2x1xf32>
    %287 = vector.extract_strided_slice %10 {offsets = [0, 51], sizes = [2, 256], strides = [1, 1]} : vector<2x358xf32> to vector<2x256xf32>
    %288 = vector.broadcast %286 : vector<2x1xf32> to vector<2x256xf32>
    %289 = arith.mulf %288, %287 : vector<2x256xf32>
    %290 = arith.addf %281, %289 : vector<2x256xf32>
    %c31 = arith.constant 31 : index
    %291 = memref.load %arg1[%c31] : memref<98xf32, #tpu.memory_space<smem>>
    %c80 = arith.constant 80 : index
    %292 = memref.load %arg1[%c80] : memref<98xf32, #tpu.memory_space<smem>>
    %293 = vector.broadcast %291 : f32 to vector<2x1xf32>
    %294 = vector.broadcast %292 : f32 to vector<2x1xf32>
    %295 = arith.select %30, %293, %294 : vector<2x1xi1>, vector<2x1xf32>
    %296 = vector.extract_strided_slice %10 {offsets = [0, 67], sizes = [2, 256], strides = [1, 1]} : vector<2x358xf32> to vector<2x256xf32>
    %297 = vector.broadcast %295 : vector<2x1xf32> to vector<2x256xf32>
    %298 = arith.mulf %297, %296 : vector<2x256xf32>
    %299 = arith.addf %290, %298 : vector<2x256xf32>
    %c38 = arith.constant 38 : index
    %300 = memref.load %arg1[%c38] : memref<98xf32, #tpu.memory_space<smem>>
    %c87 = arith.constant 87 : index
    %301 = memref.load %arg1[%c87] : memref<98xf32, #tpu.memory_space<smem>>
    %302 = vector.broadcast %300 : f32 to vector<2x1xf32>
    %303 = vector.broadcast %301 : f32 to vector<2x1xf32>
    %304 = arith.select %30, %302, %303 : vector<2x1xi1>, vector<2x1xf32>
    %305 = vector.extract_strided_slice %10 {offsets = [0, 83], sizes = [2, 256], strides = [1, 1]} : vector<2x358xf32> to vector<2x256xf32>
    %306 = vector.broadcast %304 : vector<2x1xf32> to vector<2x256xf32>
    %307 = arith.mulf %306, %305 : vector<2x256xf32>
    %308 = arith.addf %299, %307 : vector<2x256xf32>
    %c45 = arith.constant 45 : index
    %309 = memref.load %arg1[%c45] : memref<98xf32, #tpu.memory_space<smem>>
    %c94 = arith.constant 94 : index
    %310 = memref.load %arg1[%c94] : memref<98xf32, #tpu.memory_space<smem>>
    %311 = vector.broadcast %309 : f32 to vector<2x1xf32>
    %312 = vector.broadcast %310 : f32 to vector<2x1xf32>
    %313 = arith.select %30, %311, %312 : vector<2x1xi1>, vector<2x1xf32>
    %314 = vector.extract_strided_slice %10 {offsets = [0, 99], sizes = [2, 256], strides = [1, 1]} : vector<2x358xf32> to vector<2x256xf32>
    %315 = vector.broadcast %313 : vector<2x1xf32> to vector<2x256xf32>
    %316 = arith.mulf %315, %314 : vector<2x256xf32>
    %317 = arith.addf %308, %316 : vector<2x256xf32>
    %318 = arith.addf %253, %317 : vector<2x256xf32>
    %cst_19 = arith.constant 0.000000e+00 : f32
    %319 = vector.broadcast %cst_19 : f32 to vector<2x256xf32>
    %c4 = arith.constant 4 : index
    %320 = memref.load %arg1[%c4] : memref<98xf32, #tpu.memory_space<smem>>
    %c53 = arith.constant 53 : index
    %321 = memref.load %arg1[%c53] : memref<98xf32, #tpu.memory_space<smem>>
    %322 = vector.broadcast %320 : f32 to vector<2x1xf32>
    %323 = vector.broadcast %321 : f32 to vector<2x1xf32>
    %324 = arith.select %30, %322, %323 : vector<2x1xi1>, vector<2x1xf32>
    %325 = vector.extract_strided_slice %10 {offsets = [0, 4], sizes = [2, 256], strides = [1, 1]} : vector<2x358xf32> to vector<2x256xf32>
    %326 = vector.broadcast %324 : vector<2x1xf32> to vector<2x256xf32>
    %327 = arith.mulf %326, %325 : vector<2x256xf32>
    %328 = arith.addf %319, %327 : vector<2x256xf32>
    %c11 = arith.constant 11 : index
    %329 = memref.load %arg1[%c11] : memref<98xf32, #tpu.memory_space<smem>>
    %c60 = arith.constant 60 : index
    %330 = memref.load %arg1[%c60] : memref<98xf32, #tpu.memory_space<smem>>
    %331 = vector.broadcast %329 : f32 to vector<2x1xf32>
    %332 = vector.broadcast %330 : f32 to vector<2x1xf32>
    %333 = arith.select %30, %331, %332 : vector<2x1xi1>, vector<2x1xf32>
    %334 = vector.extract_strided_slice %10 {offsets = [0, 20], sizes = [2, 256], strides = [1, 1]} : vector<2x358xf32> to vector<2x256xf32>
    %335 = vector.broadcast %333 : vector<2x1xf32> to vector<2x256xf32>
    %336 = arith.mulf %335, %334 : vector<2x256xf32>
    %337 = arith.addf %328, %336 : vector<2x256xf32>
    %c18 = arith.constant 18 : index
    %338 = memref.load %arg1[%c18] : memref<98xf32, #tpu.memory_space<smem>>
    %c67 = arith.constant 67 : index
    %339 = memref.load %arg1[%c67] : memref<98xf32, #tpu.memory_space<smem>>
    %340 = vector.broadcast %338 : f32 to vector<2x1xf32>
    %341 = vector.broadcast %339 : f32 to vector<2x1xf32>
    %342 = arith.select %30, %340, %341 : vector<2x1xi1>, vector<2x1xf32>
    %343 = vector.extract_strided_slice %10 {offsets = [0, 36], sizes = [2, 256], strides = [1, 1]} : vector<2x358xf32> to vector<2x256xf32>
    %344 = vector.broadcast %342 : vector<2x1xf32> to vector<2x256xf32>
    %345 = arith.mulf %344, %343 : vector<2x256xf32>
    %346 = arith.addf %337, %345 : vector<2x256xf32>
    %c25 = arith.constant 25 : index
    %347 = memref.load %arg1[%c25] : memref<98xf32, #tpu.memory_space<smem>>
    %c74 = arith.constant 74 : index
    %348 = memref.load %arg1[%c74] : memref<98xf32, #tpu.memory_space<smem>>
    %349 = vector.broadcast %347 : f32 to vector<2x1xf32>
    %350 = vector.broadcast %348 : f32 to vector<2x1xf32>
    %351 = arith.select %30, %349, %350 : vector<2x1xi1>, vector<2x1xf32>
    %352 = vector.extract_strided_slice %10 {offsets = [0, 52], sizes = [2, 256], strides = [1, 1]} : vector<2x358xf32> to vector<2x256xf32>
    %353 = vector.broadcast %351 : vector<2x1xf32> to vector<2x256xf32>
    %354 = arith.mulf %353, %352 : vector<2x256xf32>
    %355 = arith.addf %346, %354 : vector<2x256xf32>
    %c32 = arith.constant 32 : index
    %356 = memref.load %arg1[%c32] : memref<98xf32, #tpu.memory_space<smem>>
    %c81 = arith.constant 81 : index
    %357 = memref.load %arg1[%c81] : memref<98xf32, #tpu.memory_space<smem>>
    %358 = vector.broadcast %356 : f32 to vector<2x1xf32>
    %359 = vector.broadcast %357 : f32 to vector<2x1xf32>
    %360 = arith.select %30, %358, %359 : vector<2x1xi1>, vector<2x1xf32>
    %361 = vector.extract_strided_slice %10 {offsets = [0, 68], sizes = [2, 256], strides = [1, 1]} : vector<2x358xf32> to vector<2x256xf32>
    %362 = vector.broadcast %360 : vector<2x1xf32> to vector<2x256xf32>
    %363 = arith.mulf %362, %361 : vector<2x256xf32>
    %364 = arith.addf %355, %363 : vector<2x256xf32>
    %c39 = arith.constant 39 : index
    %365 = memref.load %arg1[%c39] : memref<98xf32, #tpu.memory_space<smem>>
    %c88 = arith.constant 88 : index
    %366 = memref.load %arg1[%c88] : memref<98xf32, #tpu.memory_space<smem>>
    %367 = vector.broadcast %365 : f32 to vector<2x1xf32>
    %368 = vector.broadcast %366 : f32 to vector<2x1xf32>
    %369 = arith.select %30, %367, %368 : vector<2x1xi1>, vector<2x1xf32>
    %370 = vector.extract_strided_slice %10 {offsets = [0, 84], sizes = [2, 256], strides = [1, 1]} : vector<2x358xf32> to vector<2x256xf32>
    %371 = vector.broadcast %369 : vector<2x1xf32> to vector<2x256xf32>
    %372 = arith.mulf %371, %370 : vector<2x256xf32>
    %373 = arith.addf %364, %372 : vector<2x256xf32>
    %c46 = arith.constant 46 : index
    %374 = memref.load %arg1[%c46] : memref<98xf32, #tpu.memory_space<smem>>
    %c95 = arith.constant 95 : index
    %375 = memref.load %arg1[%c95] : memref<98xf32, #tpu.memory_space<smem>>
    %376 = vector.broadcast %374 : f32 to vector<2x1xf32>
    %377 = vector.broadcast %375 : f32 to vector<2x1xf32>
    %378 = arith.select %30, %376, %377 : vector<2x1xi1>, vector<2x1xf32>
    %379 = vector.extract_strided_slice %10 {offsets = [0, 100], sizes = [2, 256], strides = [1, 1]} : vector<2x358xf32> to vector<2x256xf32>
    %380 = vector.broadcast %378 : vector<2x1xf32> to vector<2x256xf32>
    %381 = arith.mulf %380, %379 : vector<2x256xf32>
    %382 = arith.addf %373, %381 : vector<2x256xf32>
    %c0_i32_20 = arith.constant 0 : i32
    %383 = vector.broadcast %c0_i32_20 : i32 to vector<1x256xi32>
    %384 = arith.cmpi sge, %27, %383 : vector<1x256xi32>
    %c15_i32 = arith.constant 15 : i32
    %385 = vector.broadcast %c15_i32 : i32 to vector<1x256xi32>
    %386 = arith.cmpi slt, %27, %385 : vector<1x256xi32>
    %387 = arith.andi %384, %386 : vector<1x256xi1>
    %388 = arith.extui %387 : vector<1x256xi1> to vector<1x256xi32>
    %389 = arith.sitofp %388 : vector<1x256xi32> to vector<1x256xf32>
    %390 = vector.broadcast %389 : vector<1x256xf32> to vector<2x256xf32>
    %391 = arith.mulf %390, %382 : vector<2x256xf32>
    %392 = arith.addf %318, %391 : vector<2x256xf32>
    %cst_21 = arith.constant 0.000000e+00 : f32
    %393 = vector.broadcast %cst_21 : f32 to vector<2x256xf32>
    %c5 = arith.constant 5 : index
    %394 = memref.load %arg1[%c5] : memref<98xf32, #tpu.memory_space<smem>>
    %c54 = arith.constant 54 : index
    %395 = memref.load %arg1[%c54] : memref<98xf32, #tpu.memory_space<smem>>
    %396 = vector.broadcast %394 : f32 to vector<2x1xf32>
    %397 = vector.broadcast %395 : f32 to vector<2x1xf32>
    %398 = arith.select %30, %396, %397 : vector<2x1xi1>, vector<2x1xf32>
    %399 = vector.extract_strided_slice %10 {offsets = [0, 5], sizes = [2, 256], strides = [1, 1]} : vector<2x358xf32> to vector<2x256xf32>
    %400 = vector.broadcast %398 : vector<2x1xf32> to vector<2x256xf32>
    %401 = arith.mulf %400, %399 : vector<2x256xf32>
    %402 = arith.addf %393, %401 : vector<2x256xf32>
    %c12 = arith.constant 12 : index
    %403 = memref.load %arg1[%c12] : memref<98xf32, #tpu.memory_space<smem>>
    %c61 = arith.constant 61 : index
    %404 = memref.load %arg1[%c61] : memref<98xf32, #tpu.memory_space<smem>>
    %405 = vector.broadcast %403 : f32 to vector<2x1xf32>
    %406 = vector.broadcast %404 : f32 to vector<2x1xf32>
    %407 = arith.select %30, %405, %406 : vector<2x1xi1>, vector<2x1xf32>
    %408 = vector.extract_strided_slice %10 {offsets = [0, 21], sizes = [2, 256], strides = [1, 1]} : vector<2x358xf32> to vector<2x256xf32>
    %409 = vector.broadcast %407 : vector<2x1xf32> to vector<2x256xf32>
    %410 = arith.mulf %409, %408 : vector<2x256xf32>
    %411 = arith.addf %402, %410 : vector<2x256xf32>
    %c19 = arith.constant 19 : index
    %412 = memref.load %arg1[%c19] : memref<98xf32, #tpu.memory_space<smem>>
    %c68 = arith.constant 68 : index
    %413 = memref.load %arg1[%c68] : memref<98xf32, #tpu.memory_space<smem>>
    %414 = vector.broadcast %412 : f32 to vector<2x1xf32>
    %415 = vector.broadcast %413 : f32 to vector<2x1xf32>
    %416 = arith.select %30, %414, %415 : vector<2x1xi1>, vector<2x1xf32>
    %417 = vector.extract_strided_slice %10 {offsets = [0, 37], sizes = [2, 256], strides = [1, 1]} : vector<2x358xf32> to vector<2x256xf32>
    %418 = vector.broadcast %416 : vector<2x1xf32> to vector<2x256xf32>
    %419 = arith.mulf %418, %417 : vector<2x256xf32>
    %420 = arith.addf %411, %419 : vector<2x256xf32>
    %c26 = arith.constant 26 : index
    %421 = memref.load %arg1[%c26] : memref<98xf32, #tpu.memory_space<smem>>
    %c75 = arith.constant 75 : index
    %422 = memref.load %arg1[%c75] : memref<98xf32, #tpu.memory_space<smem>>
    %423 = vector.broadcast %421 : f32 to vector<2x1xf32>
    %424 = vector.broadcast %422 : f32 to vector<2x1xf32>
    %425 = arith.select %30, %423, %424 : vector<2x1xi1>, vector<2x1xf32>
    %426 = vector.extract_strided_slice %10 {offsets = [0, 53], sizes = [2, 256], strides = [1, 1]} : vector<2x358xf32> to vector<2x256xf32>
    %427 = vector.broadcast %425 : vector<2x1xf32> to vector<2x256xf32>
    %428 = arith.mulf %427, %426 : vector<2x256xf32>
    %429 = arith.addf %420, %428 : vector<2x256xf32>
    %c33 = arith.constant 33 : index
    %430 = memref.load %arg1[%c33] : memref<98xf32, #tpu.memory_space<smem>>
    %c82 = arith.constant 82 : index
    %431 = memref.load %arg1[%c82] : memref<98xf32, #tpu.memory_space<smem>>
    %432 = vector.broadcast %430 : f32 to vector<2x1xf32>
    %433 = vector.broadcast %431 : f32 to vector<2x1xf32>
    %434 = arith.select %30, %432, %433 : vector<2x1xi1>, vector<2x1xf32>
    %435 = vector.extract_strided_slice %10 {offsets = [0, 69], sizes = [2, 256], strides = [1, 1]} : vector<2x358xf32> to vector<2x256xf32>
    %436 = vector.broadcast %434 : vector<2x1xf32> to vector<2x256xf32>
    %437 = arith.mulf %436, %435 : vector<2x256xf32>
    %438 = arith.addf %429, %437 : vector<2x256xf32>
    %c40 = arith.constant 40 : index
    %439 = memref.load %arg1[%c40] : memref<98xf32, #tpu.memory_space<smem>>
    %c89 = arith.constant 89 : index
    %440 = memref.load %arg1[%c89] : memref<98xf32, #tpu.memory_space<smem>>
    %441 = vector.broadcast %439 : f32 to vector<2x1xf32>
    %442 = vector.broadcast %440 : f32 to vector<2x1xf32>
    %443 = arith.select %30, %441, %442 : vector<2x1xi1>, vector<2x1xf32>
    %444 = vector.extract_strided_slice %10 {offsets = [0, 85], sizes = [2, 256], strides = [1, 1]} : vector<2x358xf32> to vector<2x256xf32>
    %445 = vector.broadcast %443 : vector<2x1xf32> to vector<2x256xf32>
    %446 = arith.mulf %445, %444 : vector<2x256xf32>
    %447 = arith.addf %438, %446 : vector<2x256xf32>
    %c47 = arith.constant 47 : index
    %448 = memref.load %arg1[%c47] : memref<98xf32, #tpu.memory_space<smem>>
    %c96 = arith.constant 96 : index
    %449 = memref.load %arg1[%c96] : memref<98xf32, #tpu.memory_space<smem>>
    %450 = vector.broadcast %448 : f32 to vector<2x1xf32>
    %451 = vector.broadcast %449 : f32 to vector<2x1xf32>
    %452 = arith.select %30, %450, %451 : vector<2x1xi1>, vector<2x1xf32>
    %453 = vector.extract_strided_slice %10 {offsets = [0, 101], sizes = [2, 256], strides = [1, 1]} : vector<2x358xf32> to vector<2x256xf32>
    %454 = vector.broadcast %452 : vector<2x1xf32> to vector<2x256xf32>
    %455 = arith.mulf %454, %453 : vector<2x256xf32>
    %456 = arith.addf %447, %455 : vector<2x256xf32>
    %c0_i32_22 = arith.constant 0 : i32
    %457 = vector.broadcast %c0_i32_22 : i32 to vector<1x256xi32>
    %458 = arith.cmpi sge, %27, %457 : vector<1x256xi32>
    %c14_i32 = arith.constant 14 : i32
    %459 = vector.broadcast %c14_i32 : i32 to vector<1x256xi32>
    %460 = arith.cmpi slt, %27, %459 : vector<1x256xi32>
    %461 = arith.andi %458, %460 : vector<1x256xi1>
    %462 = arith.extui %461 : vector<1x256xi1> to vector<1x256xi32>
    %463 = arith.sitofp %462 : vector<1x256xi32> to vector<1x256xf32>
    %464 = vector.broadcast %463 : vector<1x256xf32> to vector<2x256xf32>
    %465 = arith.mulf %464, %456 : vector<2x256xf32>
    %466 = arith.addf %392, %465 : vector<2x256xf32>
    %cst_23 = arith.constant 0.000000e+00 : f32
    %467 = vector.broadcast %cst_23 : f32 to vector<2x256xf32>
    %c6 = arith.constant 6 : index
    %468 = memref.load %arg1[%c6] : memref<98xf32, #tpu.memory_space<smem>>
    %c55 = arith.constant 55 : index
    %469 = memref.load %arg1[%c55] : memref<98xf32, #tpu.memory_space<smem>>
    %470 = vector.broadcast %468 : f32 to vector<2x1xf32>
    %471 = vector.broadcast %469 : f32 to vector<2x1xf32>
    %472 = arith.select %30, %470, %471 : vector<2x1xi1>, vector<2x1xf32>
    %473 = vector.extract_strided_slice %10 {offsets = [0, 6], sizes = [2, 256], strides = [1, 1]} : vector<2x358xf32> to vector<2x256xf32>
    %474 = vector.broadcast %472 : vector<2x1xf32> to vector<2x256xf32>
    %475 = arith.mulf %474, %473 : vector<2x256xf32>
    %476 = arith.addf %467, %475 : vector<2x256xf32>
    %c13 = arith.constant 13 : index
    %477 = memref.load %arg1[%c13] : memref<98xf32, #tpu.memory_space<smem>>
    %c62 = arith.constant 62 : index
    %478 = memref.load %arg1[%c62] : memref<98xf32, #tpu.memory_space<smem>>
    %479 = vector.broadcast %477 : f32 to vector<2x1xf32>
    %480 = vector.broadcast %478 : f32 to vector<2x1xf32>
    %481 = arith.select %30, %479, %480 : vector<2x1xi1>, vector<2x1xf32>
    %482 = vector.extract_strided_slice %10 {offsets = [0, 22], sizes = [2, 256], strides = [1, 1]} : vector<2x358xf32> to vector<2x256xf32>
    %483 = vector.broadcast %481 : vector<2x1xf32> to vector<2x256xf32>
    %484 = arith.mulf %483, %482 : vector<2x256xf32>
    %485 = arith.addf %476, %484 : vector<2x256xf32>
    %c20 = arith.constant 20 : index
    %486 = memref.load %arg1[%c20] : memref<98xf32, #tpu.memory_space<smem>>
    %c69 = arith.constant 69 : index
    %487 = memref.load %arg1[%c69] : memref<98xf32, #tpu.memory_space<smem>>
    %488 = vector.broadcast %486 : f32 to vector<2x1xf32>
    %489 = vector.broadcast %487 : f32 to vector<2x1xf32>
    %490 = arith.select %30, %488, %489 : vector<2x1xi1>, vector<2x1xf32>
    %491 = vector.extract_strided_slice %10 {offsets = [0, 38], sizes = [2, 256], strides = [1, 1]} : vector<2x358xf32> to vector<2x256xf32>
    %492 = vector.broadcast %490 : vector<2x1xf32> to vector<2x256xf32>
    %493 = arith.mulf %492, %491 : vector<2x256xf32>
    %494 = arith.addf %485, %493 : vector<2x256xf32>
    %c27 = arith.constant 27 : index
    %495 = memref.load %arg1[%c27] : memref<98xf32, #tpu.memory_space<smem>>
    %c76 = arith.constant 76 : index
    %496 = memref.load %arg1[%c76] : memref<98xf32, #tpu.memory_space<smem>>
    %497 = vector.broadcast %495 : f32 to vector<2x1xf32>
    %498 = vector.broadcast %496 : f32 to vector<2x1xf32>
    %499 = arith.select %30, %497, %498 : vector<2x1xi1>, vector<2x1xf32>
    %500 = vector.extract_strided_slice %10 {offsets = [0, 54], sizes = [2, 256], strides = [1, 1]} : vector<2x358xf32> to vector<2x256xf32>
    %501 = vector.broadcast %499 : vector<2x1xf32> to vector<2x256xf32>
    %502 = arith.mulf %501, %500 : vector<2x256xf32>
    %503 = arith.addf %494, %502 : vector<2x256xf32>
    %c34 = arith.constant 34 : index
    %504 = memref.load %arg1[%c34] : memref<98xf32, #tpu.memory_space<smem>>
    %c83 = arith.constant 83 : index
    %505 = memref.load %arg1[%c83] : memref<98xf32, #tpu.memory_space<smem>>
    %506 = vector.broadcast %504 : f32 to vector<2x1xf32>
    %507 = vector.broadcast %505 : f32 to vector<2x1xf32>
    %508 = arith.select %30, %506, %507 : vector<2x1xi1>, vector<2x1xf32>
    %509 = vector.extract_strided_slice %10 {offsets = [0, 70], sizes = [2, 256], strides = [1, 1]} : vector<2x358xf32> to vector<2x256xf32>
    %510 = vector.broadcast %508 : vector<2x1xf32> to vector<2x256xf32>
    %511 = arith.mulf %510, %509 : vector<2x256xf32>
    %512 = arith.addf %503, %511 : vector<2x256xf32>
    %c41 = arith.constant 41 : index
    %513 = memref.load %arg1[%c41] : memref<98xf32, #tpu.memory_space<smem>>
    %c90 = arith.constant 90 : index
    %514 = memref.load %arg1[%c90] : memref<98xf32, #tpu.memory_space<smem>>
    %515 = vector.broadcast %513 : f32 to vector<2x1xf32>
    %516 = vector.broadcast %514 : f32 to vector<2x1xf32>
    %517 = arith.select %30, %515, %516 : vector<2x1xi1>, vector<2x1xf32>
    %518 = vector.extract_strided_slice %10 {offsets = [0, 86], sizes = [2, 256], strides = [1, 1]} : vector<2x358xf32> to vector<2x256xf32>
    %519 = vector.broadcast %517 : vector<2x1xf32> to vector<2x256xf32>
    %520 = arith.mulf %519, %518 : vector<2x256xf32>
    %521 = arith.addf %512, %520 : vector<2x256xf32>
    %c48 = arith.constant 48 : index
    %522 = memref.load %arg1[%c48] : memref<98xf32, #tpu.memory_space<smem>>
    %c97 = arith.constant 97 : index
    %523 = memref.load %arg1[%c97] : memref<98xf32, #tpu.memory_space<smem>>
    %524 = vector.broadcast %522 : f32 to vector<2x1xf32>
    %525 = vector.broadcast %523 : f32 to vector<2x1xf32>
    %526 = arith.select %30, %524, %525 : vector<2x1xi1>, vector<2x1xf32>
    %527 = vector.extract_strided_slice %10 {offsets = [0, 102], sizes = [2, 256], strides = [1, 1]} : vector<2x358xf32> to vector<2x256xf32>
    %528 = vector.broadcast %526 : vector<2x1xf32> to vector<2x256xf32>
    %529 = arith.mulf %528, %527 : vector<2x256xf32>
    %530 = arith.addf %521, %529 : vector<2x256xf32>
    %c0_i32_24 = arith.constant 0 : i32
    %531 = vector.broadcast %c0_i32_24 : i32 to vector<1x256xi32>
    %532 = arith.cmpi sge, %27, %531 : vector<1x256xi32>
    %c13_i32 = arith.constant 13 : i32
    %533 = vector.broadcast %c13_i32 : i32 to vector<1x256xi32>
    %534 = arith.cmpi slt, %27, %533 : vector<1x256xi32>
    %535 = arith.andi %532, %534 : vector<1x256xi1>
    %536 = arith.extui %535 : vector<1x256xi1> to vector<1x256xi32>
    %537 = arith.sitofp %536 : vector<1x256xi32> to vector<1x256xf32>
    %538 = vector.broadcast %537 : vector<1x256xf32> to vector<2x256xf32>
    %539 = arith.mulf %538, %530 : vector<2x256xf32>
    %540 = arith.addf %466, %539 : vector<2x256xf32>
    %541 = vector.extract_strided_slice %540 {offsets = [0, 0], sizes = [1, 256], strides = [1, 1]} : vector<2x256xf32> to vector<1x256xf32>
    %542 = vector.extract_strided_slice %540 {offsets = [1, 0], sizes = [1, 256], strides = [1, 1]} : vector<2x256xf32> to vector<1x256xf32>
    %543 = arith.addf %541, %542 : vector<1x256xf32>
    %544 = arith.negf %543 : vector<1x256xf32>
    %545 = math.exp %544 : vector<1x256xf32>
    %cst_25 = arith.constant 1.000000e+00 : f32
    %546 = vector.broadcast %cst_25 : f32 to vector<1x256xf32>
    %547 = arith.addf %546, %545 : vector<1x256xf32>
    %548 = arith.divf %546, %547 : vector<1x256xf32>
    %549 = vector.shape_cast %548 : vector<1x256xf32> to vector<1x1x256xf32>
    %550 = vector.broadcast %549 : vector<1x1x256xf32> to vector<1x4x256xf32>
    %551 = arith.mulf %0, %550 : vector<1x4x256xf32>
    %c0_26 = arith.constant 0 : index
    %c0_27 = arith.constant 0 : index
    %c0_28 = arith.constant 0 : index
    %552 = vector.load %arg3[%c0_26, %c0_27, %c0_28] : memref<1x4x256xf32, #tpu.memory_space<vmem>>, vector<1x4x256xf32>
    tpu.vector_store %arg3[%c0_26, %c0_27, %c0_28], %551 {strides = array<i32>} : memref<1x4x256xf32, #tpu.memory_space<vmem>>, vector<1x4x256xf32>,
    return
  }
  func.func @transform_0(%arg0: i32, %arg1: memref<98xf32, #tpu.memory_space<smem>>) -> (i32, i32, i32) {
    %c0_i32 = arith.constant 0 : i32
    %c0_i32_0 = arith.constant 0 : i32
    %c0_i32_1 = arith.constant 0 : i32
    return %arg0, %c0_i32, %c0_i32_0 : i32, i32, i32
  }
  func.func @transform_1(%arg0: i32, %arg1: memref<98xf32, #tpu.memory_space<smem>>) -> (i32, i32, i32) {
    %c0_i32 = arith.constant 0 : i32
    %c0_i32_0 = arith.constant 0 : i32
    %c0_i32_1 = arith.constant 0 : i32
    return %arg0, %c0_i32, %c0_i32_0 : i32, i32, i32
  }
}

</mosaic_0001>

<llo_original>
// kernel: tpu_custom_call.1
$region0: #{tpu_custom_call.1}
  #allocation0 [shape = 'u32[]', space=smem, size = 0x4, offset = 0x4, fixed_abs, tag = 'smem constant byte address 0x4 - core index']
  #allocation1 [shape = 'u32[144,128]{1,0:T(1,128)}', space=vmem, size = 0x12000, scoped, tag = 'internal scratch']
  #allocation2 [shape = 's32[1]{0}', space=sflag, size = 0x4, scoped, tag = 'scoped memory for tpu_custom_call.1']
  #allocation3 [shape = 'u8[512]{0}', space=smem, size = 0x200, scoped, tag = 'prefetched SMEM operand 0']
  %s0 = inlined_call_operand.hbm [shape: f32[98], index: 0, kind: input, shape index: {}]
  %s1 = inlined_call_operand.hbm [shape: f32[2,4,256], index: 1, kind: input, shape index: {}]
  %s2 = inlined_call_operand.hbm [shape: f32[2,4,256], index: 2, kind: output, shape index: {}]
  %s3 = sld [smem:[#allocation0]]
  $region41: #{tpu_custom_call.1} parent=0
    _
  %s5 = ssub.s32 1, %s3
  %s6 = scalar_select 0, %s5, %s3
  %8 = dma.hbm_to_smem %s0, 16, [#allocation3], [#allocation2]
  %9 = dma.done [#allocation2], 16
  %10 = sfence
  $region1: #{tpu_custom_call.1} parent=0
    #allocation4 [shape = 'u8[8192]{0}', space=vmem, size = 0x2000, scoped, tag = 'input window, operand 1']
    #allocation5 [shape = 's32[2]{0}', space=sflag, size = 0x8, scoped, tag = 'scoped memory for tpu_custom_call.1']
    #allocation6 [shape = 's32[2]{0}', space=sflag, size = 0x8, scoped, tag = 'scoped memory for tpu_custom_call.1']
    #allocation7 [shape = 'u8[8192]{0}', space=vmem, size = 0x2000, scoped, tag = 'output window, operand 0']
    %11 = vsyncpa [#allocation5], 0
    %s12 = scalar_lea.sflag [#allocation5], 1
    %13 = vsyncpa %s12, 0
    %14 = vsyncpa [#allocation6], 0
    %s15 = scalar_lea.sflag [#allocation6], 1
    %16 = vsyncpa %s15, 0
    loop: start=0, step=1, limit=4
    $region2: #{tpu_custom_call.1} parent=1 // loop_pre_header
      _
    $region3: #{tpu_custom_call.1} parent=1 // loop_header
      %s18 = sphi 0, %s22
      %p19 = scmp.ge.s32.totalorder %s18, 4
      %s28 = sphi 0, %s30
      %s31 = sphi 0, %s28
      %s32 = sphi 0, %s31
      %s48 = sphi 0, %s32
      %s54 = sphi 0, %s56
      %s57 = sphi 0, %s54
      %s58 = sphi 0, %s57
      %s74 = sphi 0, %s58
    $region4: #{tpu_custom_call.1} parent=1 // loop_header_branch
      %21 = sbr.rel (%p19) target = $region8
    $region5: #{tpu_custom_call.1} parent=1 // loop_body
      %s23 = ssub.s32 %s18, 1
      %s24 = ssub.s32 %s18, 2
      %s25 = sadd.s32 %s18, 1
      %s26 = ssub.s32 %s18, %s25
      %p27 = scmp.eq.s32.totalorder %s26, 0
      %s29 = sadd.s32 %s28, 1
      %s30 = scalar_select %p27, %s28, %s29
      %p33 = pneg %p27
      %p34 = scmp.eq.s32.totalorder %s18, 1
      %p35 = por %p33, %p34
      %p36 = scmp.ne.s32.totalorder %s28, %s31
      %p37 = scmp.eq.s32.totalorder %s18, 0
      %p38 = por %p36, %p37
      %p39 = scmp.ne.s32.totalorder %s28, %s31
      %p40 = scmp.eq.s32.totalorder %s23, 1
      %p41 = por %p39, %p40
      %p42 = scmp.ne.s32.totalorder %s31, %s32
      %p43 = scmp.eq.s32.totalorder %s23, 0
      %p44 = por %p42, %p43
      %p45 = scmp.ne.s32.totalorder %s31, %s32
      %p46 = scmp.eq.s32.totalorder %s24, 1
      %p47 = por %p45, %p46
      %p49 = scmp.ne.s32.totalorder %s32, %s48
      %p50 = scmp.eq.s32.totalorder %s24, 0
      %p51 = por %p49, %p50
      %s52 = ssub.s32 %s18, %s25
      %p53 = scmp.eq.s32.totalorder %s52, 0
      %s55 = sadd.s32 %s54, 1
      %s56 = scalar_select %p53, %s54, %s55
      %p59 = pneg %p53
      %p60 = scmp.eq.s32.totalorder %s18, 1
      %p61 = por %p59, %p60
      %p62 = scmp.ne.s32.totalorder %s54, %s57
      %p63 = scmp.eq.s32.totalorder %s18, 0
      %p64 = por %p62, %p63
      %p65 = scmp.ne.s32.totalorder %s54, %s57
      %p66 = scmp.eq.s32.totalorder %s23, 1
      %p67 = por %p65, %p66
      %p68 = scmp.ne.s32.totalorder %s57, %s58
      %p69 = scmp.eq.s32.totalorder %s23, 0
      %p70 = por %p68, %p69
      %p71 = scmp.ne.s32.totalorder %s57, %s58
      %p72 = scmp.eq.s32.totalorder %s24, 1
      %p73 = por %p71, %p72
      %p75 = scmp.ne.s32.totalorder %s58, %s74
      %p76 = scmp.eq.s32.totalorder %s24, 0
      %p77 = por %p75, %p76
      %p78 = scmp.le.s32.totalorder 1, %s18
      %p79 = scmp.lt.s32.totalorder %s18, 3
      %p80 = pnand %p78, %p79
      %p81 = pneg %p80
      // Predicated region
      $region9: #{tpu_custom_call.1} parent=5 // pred_check
        _
      $region10: #{tpu_custom_call.1} parent=5 // pred_check_branch
        %83 = sbr.rel (%p80) target = $region12
      $region11: #{tpu_custom_call.1} parent=5 // pred_region
        %s84 = ssub.s32 %s18, 1
      $region12: #{tpu_custom_call.1} parent=5 // pred_fallthru
        _
      %p85 = scmp.lt.s32.totalorder %s18, 2
      // Predicated region
      $region13: #{tpu_custom_call.1} parent=5 // pred_check
        %p86 = pneg %p85
      $region14: #{tpu_custom_call.1} parent=5 // pred_check_branch
        %88 = sbr.rel (%p86) target = $region16
      $region15: #{tpu_custom_call.1} parent=5 // pred_region
        // Predicated region
        $region17: #{tpu_custom_call.1} parent=15 // pred_check
          %p89 = pneg %p38
        $region18: #{tpu_custom_call.1} parent=15 // pred_check_branch
          %91 = sbr.rel (%p89) target = $region20
        $region19: #{tpu_custom_call.1} parent=15 // pred_region
          %s92 = sand.u32 %s28, 1
          %s93 = scalar_lea.sflag [#allocation5], %s92
          %s94 = sand.u32 %s28, 1
          %s95 = smul.addr %s94, 8
          %s96 = scalar_lea.vmem [#allocation4], %s95
          %s98 = ssub.s32 128, 128
          %99 = vsyncadd %s93, %s98
          %s100 = smul.addr %s18, 2
          %s101 = smul.addr %s100, 64
          %s102 = scalar_lea.hbm %s1, %s101
          %s104 = sshll.u32 %s96, 4
          %s105 = int_to_ptr.vmem [resolvable:$true] %s104
          %107 = dma.hbm_to_vmem [thread:$0]  %s102, 128, %s105, %s93
        $region20: #{tpu_custom_call.1} parent=15 // pred_fallthru
          _
      $region16: #{tpu_custom_call.1} parent=5 // pred_fallthru
        _
      %p108 = scmp.le.s32.totalorder 1, %s18
      %p109 = scmp.lt.s32.totalorder %s18, 3
      %p110 = pnand %p108, %p109
      %p111 = pneg %p110
      // Predicated region
      $region21: #{tpu_custom_call.1} parent=5 // pred_check
        _
      $region22: #{tpu_custom_call.1} parent=5 // pred_check_branch
        %113 = sbr.rel (%p110) target = $region24
      $region23: #{tpu_custom_call.1} parent=5 // pred_region
        %s114 = ssub.s32 %s18, 1
        %s115 = sand.u32 %s31, 1
        %s116 = scalar_lea.sflag [#allocation5], %s115
        %s117 = sand.u32 %s31, 1
        %s118 = smul.addr %s117, 8
        %s119 = scalar_lea.vmem [#allocation4], %s118
        // Predicated region
        $region25: #{tpu_custom_call.1} parent=23 // pred_check
          %p120 = pneg %p44
        $region26: #{tpu_custom_call.1} parent=23 // pred_check_branch
          %122 = sbr.rel (%p120) target = $region28
        $region27: #{tpu_custom_call.1} parent=23 // pred_region
          %123 = dma.done %s116, 128
        $region28: #{tpu_custom_call.1} parent=23 // pred_fallthru
          _
        %s124 = sand.u32 %s31, 1
        %s125 = scalar_lea.sflag [#allocation5], %s124
        %s126 = sand.u32 %s31, 1
        %s127 = smul.addr %s126, 8
        %s128 = scalar_lea.vmem [#allocation4], %s127
        %p129 = pneg %p44
        %p130 = pneg %p41
        %p131 = pneg %p70
        %p132 = pneg %p67
        %s133 = sand.u32 %s57, 1
        %s134 = scalar_lea.sflag [#allocation6], %s133
        %s135 = sand.u32 %s57, 1
        %s136 = smul.addr %s135, 8
        %s137 = scalar_lea.vmem [#allocation7], %s136
        %v138 = vld [vmem:[%s119] sm:$0xff]
        %v140 = vcombine.high %v138, %v138
        %vm142 = vcmask 1043456
        %v143 = vsel %vm142, %v138, 0.0
        %v144 = vrot.slane %v143, 4
        %v145 = vadd.f32 %v143, %v144
        %v146 = vrot.slane %v145, 2
        %v147 = vadd.f32 %v145, %v146
        %v148 = vrot.slane %v147, 1
        %v149 = vadd.f32 %v147, %v148
        %v150 = vsel %vm142, %v140, 0.0
        %v151 = vrot.slane %v150, 4
        %v152 = vadd.f32 %v150, %v151
        %v153 = vrot.slane %v152, 2
        %v154 = vadd.f32 %v152, %v153
        %v155 = vrot.slane %v154, 1
        %v156 = vadd.f32 %v154, %v155
        %v157 = vrcp.pop 4.0
        %v158 = vmul.f32 %v149, %v157
        %v159 = vmul.f32 %v156, %v157
        %v160 = vsel %vm142, %v138, -inf
        %v161 = vrot.slane %v160, 4
        %v162 = vmax.f32 %v160, %v161
        %v163 = vrot.slane %v162, 2
        %v164 = vmax.f32 %v162, %v163
        %v165 = vrot.slane %v164, 1
        %v166 = vmax.f32 %v164, %v165
        %v167 = vsel %vm142, %v140, -inf
        %v168 = vrot.slane %v167, 4
        %v169 = vmax.f32 %v167, %v168
        %v170 = vrot.slane %v169, 2
        %v171 = vmax.f32 %v169, %v170
        %v172 = vrot.slane %v171, 1
        %v173 = vmax.f32 %v171, %v172
        %vm174 = vcmask 1040384
        %v175 = vsel %vm174, %v158, %v166
        %v176 = vsel %vm174, %v159, %v173
        %179 = vrot.lane.b32.xlu0 %v175, 51
        %v180 = vpop.permute.xlu0 %179
        %181 = vrot.lane.b32.xlu0 %v176, 51
        %v182 = vpop.permute.xlu0 %181
        %vm183 = vcmask 416768
        %v184 = vsel %vm183, %v180, %v182
        %v188 = vsel %vm183, 0.0, %v180
        %v189 = vsel %vm183, %v182, 0.0
        %v190 = vlaneseq
        %v191 = vand.u32 %v190, 127
        %v192 = vadd.s32 %v191, 128
        %vm193 = vcmp.lt.s32.totalorder %v191, 0
        %v194 = vsub.s32 0, %v191
        %v195 = vsel %vm193, %v194, %v191
        %v196 = vshrl.u32 %v195, 4
        %v197 = vand.u32 %v195, 15
        %v198 = vsub.s32 0, %v197
        %v199 = vsel %vm193, %v198, %v197
        %vm200 = vcmp.lt.s32.totalorder %v192, 0
        %v201 = vsub.s32 0, %v192
        %v202 = vsel %vm200, %v201, %v192
        %v203 = vshrl.u32 %v202, 4
        %v204 = vand.u32 %v202, 15
        %v205 = vsub.s32 0, %v204
        %v206 = vsel %vm200, %v205, %v204
        %vm207 = vcmp.ne.s32.totalorder %v199, 0
        %vm208 = vcmp.ne.s32.totalorder %v206, 0
        %vm209 = vcmp.lt.s32.totalorder %v199, 0
        %vm210 = vcmp.lt.s32.totalorder %v206, 0
        %vm211 = vmand %vm209, %vm207
        %vm212 = vmand %vm210, %vm208
        %v213 = vadd.s32 %v199, 16
        %v214 = vadd.s32 %v206, 16
        %v215 = vsel %vm211, %v213, %v199
        %v216 = vsel %vm212, %v214, %v206
        %v217 = vlaneseq
        %v218 = vshrl.u32 %v217, 7
        %vm219 = vcmp.lt.s32.totalorder %v218, 1
        %s220 = sld [smem:[#allocation3]]
        %s221 = sld [smem:[#allocation3 + $0x31]]
        %v222 = vstv %s220
        %v223 = vstv %s221
        %v224 = vsel %vm219, %v222, %v223
        %v225 = vmul.f32 %v224, %v188
        %v226 = vmul.f32 %v224, %v184
        %v227 = vadd.f32 %v225, 0.0
        %v228 = vadd.f32 %v226, 0.0
        %s229 = sld [smem:[#allocation3 + $0x7]]
        %s230 = sld [smem:[#allocation3 + $0x38]]
        %v231 = vstv %s229
        %v232 = vstv %s230
        %v233 = vsel %vm219, %v231, %v232
        %v234 = vmul.f32 %v233, %v188
        %v235 = vmul.f32 %v233, %v184
        %v236 = vmul.f32 %v233, %v189
        %240 = vrot.lane.b32.xlu0 %v234, 112
        %v241 = vpop.permute.xlu0 %240
        %242 = vrot.lane.b32.xlu0 %v235, 112
        %v243 = vpop.permute.xlu0 %242
        %244 = vrot.lane.b32.xlu0 %v236, 112
        %v245 = vpop.permute.xlu0 %244
        %vm246 = vcmask 916480
        %v247 = vsel %vm246, %v241, %v243
        %v248 = vsel %vm246, %v243, %v245
        %v251 = vadd.f32 %v227, %v247
        %v252 = vadd.f32 %v228, %v248
        %s253 = sld [smem:[#allocation3 + $0xe]]
        %s254 = sld [smem:[#allocation3 + $0x3f]]
        %v255 = vstv %s253
        %v256 = vstv %s254
        %v257 = vsel %vm219, %v255, %v256
        %v258 = vmul.f32 %v257, %v188
        %v259 = vmul.f32 %v257, %v184
        %v260 = vmul.f32 %v257, %v189
        %264 = vrot.lane.b32.xlu0 %v258, 96
        %v265 = vpop.permute.xlu0 %264
        %266 = vrot.lane.b32.xlu0 %v259, 96
        %v267 = vpop.permute.xlu0 %266
        %268 = vrot.lane.b32.xlu0 %v260, 96
        %v269 = vpop.permute.xlu0 %268
        %vm270 = vcmask 785408
        %v271 = vsel %vm270, %v265, %v267
        %v272 = vsel %vm270, %v267, %v269
        %v275 = vadd.f32 %v251, %v271
        %v276 = vadd.f32 %v252, %v272
        %s277 = sld [smem:[#allocation3 + $0x15]]
        %s278 = sld [smem:[#allocation3 + $0x46]]
        %v279 = vstv %s277
        %v280 = vstv %s278
        %v281 = vsel %vm219, %v279, %v280
        %v282 = vmul.f32 %v281, %v188
        %v283 = vmul.f32 %v281, %v184
        %v284 = vmul.f32 %v281, %v189
        %288 = vrot.lane.b32.xlu0 %v282, 80
        %v289 = vpop.permute.xlu0 %288
        %290 = vrot.lane.b32.xlu0 %v283, 80
        %v291 = vpop.permute.xlu0 %290
        %292 = vrot.lane.b32.xlu0 %v284, 80
        %v293 = vpop.permute.xlu0 %292
        %vm294 = vcmask 654336
        %v295 = vsel %vm294, %v289, %v291
        %v296 = vsel %vm294, %v291, %v293
        %v299 = vadd.f32 %v275, %v295
        %v300 = vadd.f32 %v276, %v296
        %s301 = sld [smem:[#allocation3 + $0x1c]]
        %s302 = sld [smem:[#allocation3 + $0x4d]]
        %v303 = vstv %s301
        %v304 = vstv %s302
        %v305 = vsel %vm219, %v303, %v304
        %v306 = vmul.f32 %v305, %v188
        %v307 = vmul.f32 %v305, %v184
        %v308 = vmul.f32 %v305, %v189
        %312 = vrot.lane.b32.xlu0 %v306, 64
        %v313 = vpop.permute.xlu0 %312
        %314 = vrot.lane.b32.xlu0 %v307, 64
        %v315 = vpop.permute.xlu0 %314
        %316 = vrot.lane.b32.xlu0 %v308, 64
        %v317 = vpop.permute.xlu0 %316
        %vm318 = vcmask 523264
        %v319 = vsel %vm318, %v313, %v315
        %v320 = vsel %vm318, %v315, %v317
        %v323 = vadd.f32 %v299, %v319
        %v324 = vadd.f32 %v300, %v320
        %s325 = sld [smem:[#allocation3 + $0x23]]
        %s326 = sld [smem:[#allocation3 + $0x54]]
        %v327 = vstv %s325
        %v328 = vstv %s326
        %v329 = vsel %vm219, %v327, %v328
        %v330 = vmul.f32 %v329, %v188
        %v331 = vmul.f32 %v329, %v184
        %v332 = vmul.f32 %v329, %v189
        %336 = vrot.lane.b32.xlu0 %v330, 48
        %v337 = vpop.permute.xlu0 %336
        %338 = vrot.lane.b32.xlu0 %v331, 48
        %v339 = vpop.permute.xlu0 %338
        %340 = vrot.lane.b32.xlu0 %v332, 48
        %v341 = vpop.permute.xlu0 %340
        %vm342 = vcmask 392192
        %v343 = vsel %vm342, %v337, %v339
        %v344 = vsel %vm342, %v339, %v341
        %v347 = vadd.f32 %v323, %v343
        %v348 = vadd.f32 %v324, %v344
        %s349 = sld [smem:[#allocation3 + $0x2a]]
        %s350 = sld [smem:[#allocation3 + $0x5b]]
        %v351 = vstv %s349
        %v352 = vstv %s350
        %v353 = vsel %vm219, %v351, %v352
        %v354 = vmul.f32 %v353, %v188
        %v355 = vmul.f32 %v353, %v184
        %v356 = vmul.f32 %v353, %v189
        %360 = vrot.lane.b32.xlu0 %v354, 32
        %v361 = vpop.permute.xlu0 %360
        %362 = vrot.lane.b32.xlu0 %v355, 32
        %v363 = vpop.permute.xlu0 %362
        %364 = vrot.lane.b32.xlu0 %v356, 32
        %v365 = vpop.permute.xlu0 %364
        %vm366 = vcmask 261120
        %v367 = vsel %vm366, %v361, %v363
        %v368 = vsel %vm366, %v363, %v365
        %v371 = vadd.f32 %v347, %v367
        %v372 = vadd.f32 %v348, %v368
        %vm373 = vcmp.ge.s32.totalorder %v215, 3
        %vm374 = vcmp.ge.s32.totalorder %v216, 3
        %vm375 = vcmp.lt.s32.totalorder %v215, 16
        %vm376 = vcmp.lt.s32.totalorder %v216, 16
        %vm377 = vmand %vm373, %vm375
        %vm378 = vmand %vm374, %vm376
        %v379 = vsel %vm377, 1, 0
        %v380 = vsel %vm378, 1, 0
        %v381 = vcvt.s32.f32 %v379
        %v382 = vcvt.s32.f32 %v380
        %v383 = vmul.f32 %v381, %v371
        %v384 = vmul.f32 %v382, %v372
        %v385 = vadd.f32 %v383, 0.0
        %v386 = vadd.f32 %v384, 0.0
        %s387 = sld [smem:[#allocation3 + $0x1]]
        %s388 = sld [smem:[#allocation3 + $0x32]]
        %v389 = vstv %s387
        %v390 = vstv %s388
        %v391 = vsel %vm219, %v389, %v390
        %v392 = vmul.f32 %v391, %v188
        %v393 = vmul.f32 %v391, %v184
        %v394 = vmul.f32 %v391, %v189
        %v395 = vadd.f32 %v392, 0.0
        %v396 = vadd.f32 %v393, 0.0
        %v397 = vadd.f32 %v394, 0.0
        %s398 = sld [smem:[#allocation3 + $0x8]]
        %s399 = sld [smem:[#allocation3 + $0x39]]
        %v400 = vstv %s398
        %v401 = vstv %s399
        %v402 = vsel %vm219, %v400, %v401
        %v403 = vmul.f32 %v402, %v188
        %v404 = vmul.f32 %v402, %v184
        %v405 = vmul.f32 %v402, %v189
        %409 = vrot.lane.b32.xlu0 %v403, 112
        %v410 = vpop.permute.xlu0 %409
        %411 = vrot.lane.b32.xlu0 %v404, 112
        %v412 = vpop.permute.xlu0 %411
        %413 = vrot.lane.b32.xlu0 %v405, 112
        %v414 = vpop.permute.xlu0 %413
        %v415 = vsel %vm246, %v410, %v412
        %v416 = vsel %vm246, %v412, %v414
        %v420 = vadd.f32 %v395, %v415
        %v421 = vadd.f32 %v396, %v416
        %v422 = vadd.f32 %v397, %v414
        %s423 = sld [smem:[#allocation3 + $0xf]]
        %s424 = sld [smem:[#allocation3 + $0x40]]
        %v425 = vstv %s423
        %v426 = vstv %s424
        %v427 = vsel %vm219, %v425, %v426
        %v428 = vmul.f32 %v427, %v188
        %v429 = vmul.f32 %v427, %v184
        %v430 = vmul.f32 %v427, %v189
        %434 = vrot.lane.b32.xlu0 %v428, 96
        %v435 = vpop.permute.xlu0 %434
        %436 = vrot.lane.b32.xlu0 %v429, 96
        %v437 = vpop.permute.xlu0 %436
        %438 = vrot.lane.b32.xlu0 %v430, 96
        %v439 = vpop.permute.xlu0 %438
        %v440 = vsel %vm270, %v435, %v437
        %v441 = vsel %vm270, %v437, %v439
        %v445 = vadd.f32 %v420, %v440
        %v446 = vadd.f32 %v421, %v441
        %v447 = vadd.f32 %v422, %v439
        %s448 = sld [smem:[#allocation3 + $0x16]]
        %s449 = sld [smem:[#allocation3 + $0x47]]
        %v450 = vstv %s448
        %v451 = vstv %s449
        %v452 = vsel %vm219, %v450, %v451
        %v453 = vmul.f32 %v452, %v188
        %v454 = vmul.f32 %v452, %v184
        %v455 = vmul.f32 %v452, %v189
        %459 = vrot.lane.b32.xlu0 %v453, 80
        %v460 = vpop.permute.xlu0 %459
        %461 = vrot.lane.b32.xlu0 %v454, 80
        %v462 = vpop.permute.xlu0 %461
        %463 = vrot.lane.b32.xlu0 %v455, 80
        %v464 = vpop.permute.xlu0 %463
        %v465 = vsel %vm294, %v460, %v462
        %v466 = vsel %vm294, %v462, %v464
        %v470 = vadd.f32 %v445, %v465
        %v471 = vadd.f32 %v446, %v466
        %v472 = vadd.f32 %v447, %v464
        %s473 = sld [smem:[#allocation3 + $0x1d]]
        %s474 = sld [smem:[#allocation3 + $0x4e]]
        %v475 = vstv %s473
        %v476 = vstv %s474
        %v477 = vsel %vm219, %v475, %v476
        %v478 = vmul.f32 %v477, %v188
        %v479 = vmul.f32 %v477, %v184
        %v480 = vmul.f32 %v477, %v189
        %484 = vrot.lane.b32.xlu0 %v478, 64
        %v485 = vpop.permute.xlu0 %484
        %486 = vrot.lane.b32.xlu0 %v479, 64
        %v487 = vpop.permute.xlu0 %486
        %488 = vrot.lane.b32.xlu0 %v480, 64
        %v489 = vpop.permute.xlu0 %488
        %v490 = vsel %vm318, %v485, %v487
        %v491 = vsel %vm318, %v487, %v489
        %v495 = vadd.f32 %v470, %v490
        %v496 = vadd.f32 %v471, %v491
        %v497 = vadd.f32 %v472, %v489
        %s498 = sld [smem:[#allocation3 + $0x24]]
        %s499 = sld [smem:[#allocation3 + $0x55]]
        %v500 = vstv %s498
        %v501 = vstv %s499
        %v502 = vsel %vm219, %v500, %v501
        %v503 = vmul.f32 %v502, %v188
        %v504 = vmul.f32 %v502, %v184
        %v505 = vmul.f32 %v502, %v189
        %509 = vrot.lane.b32.xlu0 %v503, 48
        %v510 = vpop.permute.xlu0 %509
        %511 = vrot.lane.b32.xlu0 %v504, 48
        %v512 = vpop.permute.xlu0 %511
        %513 = vrot.lane.b32.xlu0 %v505, 48
        %v514 = vpop.permute.xlu0 %513
        %v515 = vsel %vm342, %v510, %v512
        %v516 = vsel %vm342, %v512, %v514
        %v520 = vadd.f32 %v495, %v515
        %v521 = vadd.f32 %v496, %v516
        %v522 = vadd.f32 %v497, %v514
        %s523 = sld [smem:[#allocation3 + $0x2b]]
        %s524 = sld [smem:[#allocation3 + $0x5c]]
        %v525 = vstv %s523
        %v526 = vstv %s524
        %v527 = vsel %vm219, %v525, %v526
        %v528 = vmul.f32 %v527, %v188
        %v529 = vmul.f32 %v527, %v184
        %v530 = vmul.f32 %v527, %v189
        %534 = vrot.lane.b32.xlu0 %v528, 32
        %v535 = vpop.permute.xlu0 %534
        %536 = vrot.lane.b32.xlu0 %v529, 32
        %v537 = vpop.permute.xlu0 %536
        %538 = vrot.lane.b32.xlu0 %v530, 32
        %v539 = vpop.permute.xlu0 %538
        %v540 = vsel %vm366, %v535, %v537
        %v541 = vsel %vm366, %v537, %v539
        %v545 = vadd.f32 %v520, %v540
        %v546 = vadd.f32 %v521, %v541
        %v547 = vadd.f32 %v522, %v539
        %vm548 = vcmp.ge.s32.totalorder %v215, 2
        %vm549 = vcmp.ge.s32.totalorder %v216, 2
        %vm550 = vmand %vm548, %vm375
        %vm551 = vmand %vm549, %vm376
        %v552 = vsel %vm550, 1, 0
        %v553 = vsel %vm551, 1, 0
        %v554 = vcvt.s32.f32 %v552
        %v555 = vcvt.s32.f32 %v553
        %559 = vrot.lane.b32.xlu0 %v545, 127
        %v560 = vpop.permute.xlu0 %559
        %561 = vrot.lane.b32.xlu0 %v546, 127
        %v562 = vpop.permute.xlu0 %561
        %563 = vrot.lane.b32.xlu0 %v547, 127
        %v564 = vpop.permute.xlu0 %563
        %vm565 = vcmask 1039360
        %v566 = vsel %vm565, %v560, %v562
        %v567 = vsel %vm565, %v562, %v564
        %v570 = vmul.f32 %v554, %v566
        %v571 = vmul.f32 %v555, %v567
        %v572 = vadd.f32 %v385, %v570
        %v573 = vadd.f32 %v386, %v571
        %s574 = sld [smem:[#allocation3 + $0x2]]
        %s575 = sld [smem:[#allocation3 + $0x33]]
        %v576 = vstv %s574
        %v577 = vstv %s575
        %v578 = vsel %vm219, %v576, %v577
        %v579 = vmul.f32 %v578, %v188
        %v580 = vmul.f32 %v578, %v184
        %v581 = vmul.f32 %v578, %v189
        %v582 = vadd.f32 %v579, 0.0
        %v583 = vadd.f32 %v580, 0.0
        %v584 = vadd.f32 %v581, 0.0
        %s585 = sld [smem:[#allocation3 + $0x9]]
        %s586 = sld [smem:[#allocation3 + $0x3a]]
        %v587 = vstv %s585
        %v588 = vstv %s586
        %v589 = vsel %vm219, %v587, %v588
        %v590 = vmul.f32 %v589, %v188
        %v591 = vmul.f32 %v589, %v184
        %v592 = vmul.f32 %v589, %v189
        %596 = vrot.lane.b32.xlu0 %v590, 112
        %v597 = vpop.permute.xlu0 %596
        %598 = vrot.lane.b32.xlu0 %v591, 112
        %v599 = vpop.permute.xlu0 %598
        %600 = vrot.lane.b32.xlu0 %v592, 112
        %v601 = vpop.permute.xlu0 %600
        %v602 = vsel %vm246, %v597, %v599
        %v603 = vsel %vm246, %v599, %v601
        %v607 = vadd.f32 %v582, %v602
        %v608 = vadd.f32 %v583, %v603
        %v609 = vadd.f32 %v584, %v601
        %s610 = sld [smem:[#allocation3 + $0x10]]
        %s611 = sld [smem:[#allocation3 + $0x41]]
        %v612 = vstv %s610
        %v613 = vstv %s611
        %v614 = vsel %vm219, %v612, %v613
        %v615 = vmul.f32 %v614, %v188
        %v616 = vmul.f32 %v614, %v184
        %v617 = vmul.f32 %v614, %v189
        %621 = vrot.lane.b32.xlu0 %v615, 96
        %v622 = vpop.permute.xlu0 %621
        %623 = vrot.lane.b32.xlu0 %v616, 96
        %v624 = vpop.permute.xlu0 %623
        %625 = vrot.lane.b32.xlu0 %v617, 96
        %v626 = vpop.permute.xlu0 %625
        %v627 = vsel %vm270, %v622, %v624
        %v628 = vsel %vm270, %v624, %v626
        %v632 = vadd.f32 %v607, %v627
        %v633 = vadd.f32 %v608, %v628
        %v634 = vadd.f32 %v609, %v626
        %s635 = sld [smem:[#allocation3 + $0x17]]
        %s636 = sld [smem:[#allocation3 + $0x48]]
        %v637 = vstv %s635
        %v638 = vstv %s636
        %v639 = vsel %vm219, %v637, %v638
        %v640 = vmul.f32 %v639, %v188
        %v641 = vmul.f32 %v639, %v184
        %v642 = vmul.f32 %v639, %v189
        %646 = vrot.lane.b32.xlu0 %v640, 80
        %v647 = vpop.permute.xlu0 %646
        %648 = vrot.lane.b32.xlu0 %v641, 80
        %v649 = vpop.permute.xlu0 %648
        %650 = vrot.lane.b32.xlu0 %v642, 80
        %v651 = vpop.permute.xlu0 %650
        %v652 = vsel %vm294, %v647, %v649
        %v653 = vsel %vm294, %v649, %v651
        %v657 = vadd.f32 %v632, %v652
        %v658 = vadd.f32 %v633, %v653
        %v659 = vadd.f32 %v634, %v651
        %s660 = sld [smem:[#allocation3 + $0x1e]]
        %s661 = sld [smem:[#allocation3 + $0x4f]]
        %v662 = vstv %s660
        %v663 = vstv %s661
        %v664 = vsel %vm219, %v662, %v663
        %v665 = vmul.f32 %v664, %v188
        %v666 = vmul.f32 %v664, %v184
        %v667 = vmul.f32 %v664, %v189
        %671 = vrot.lane.b32.xlu0 %v665, 64
        %v672 = vpop.permute.xlu0 %671
        %673 = vrot.lane.b32.xlu0 %v666, 64
        %v674 = vpop.permute.xlu0 %673
        %675 = vrot.lane.b32.xlu0 %v667, 64
        %v676 = vpop.permute.xlu0 %675
        %v677 = vsel %vm318, %v672, %v674
        %v678 = vsel %vm318, %v674, %v676
        %v682 = vadd.f32 %v657, %v677
        %v683 = vadd.f32 %v658, %v678
        %v684 = vadd.f32 %v659, %v676
        %s685 = sld [smem:[#allocation3 + $0x25]]
        %s686 = sld [smem:[#allocation3 + $0x56]]
        %v687 = vstv %s685
        %v688 = vstv %s686
        %v689 = vsel %vm219, %v687, %v688
        %v690 = vmul.f32 %v689, %v188
        %v691 = vmul.f32 %v689, %v184
        %v692 = vmul.f32 %v689, %v189
        %696 = vrot.lane.b32.xlu0 %v690, 48
        %v697 = vpop.permute.xlu0 %696
        %698 = vrot.lane.b32.xlu0 %v691, 48
        %v699 = vpop.permute.xlu0 %698
        %700 = vrot.lane.b32.xlu0 %v692, 48
        %v701 = vpop.permute.xlu0 %700
        %v702 = vsel %vm342, %v697, %v699
        %v703 = vsel %vm342, %v699, %v701
        %v707 = vadd.f32 %v682, %v702
        %v708 = vadd.f32 %v683, %v703
        %v709 = vadd.f32 %v684, %v701
        %s710 = sld [smem:[#allocation3 + $0x2c]]
        %s711 = sld [smem:[#allocation3 + $0x5d]]
        %v712 = vstv %s710
        %v713 = vstv %s711
        %v714 = vsel %vm219, %v712, %v713
        %v715 = vmul.f32 %v714, %v188
        %v716 = vmul.f32 %v714, %v184
        %v717 = vmul.f32 %v714, %v189
        %721 = vrot.lane.b32.xlu0 %v715, 32
        %v722 = vpop.permute.xlu0 %721
        %723 = vrot.lane.b32.xlu0 %v716, 32
        %v724 = vpop.permute.xlu0 %723
        %725 = vrot.lane.b32.xlu0 %v717, 32
        %v726 = vpop.permute.xlu0 %725
        %v727 = vsel %vm366, %v722, %v724
        %v728 = vsel %vm366, %v724, %v726
        %v732 = vadd.f32 %v707, %v727
        %v733 = vadd.f32 %v708, %v728
        %v734 = vadd.f32 %v709, %v726
        %vm735 = vcmp.ge.s32.totalorder %v215, 1
        %vm736 = vcmp.ge.s32.totalorder %v216, 1
        %vm737 = vmand %vm735, %vm375
        %vm738 = vmand %vm736, %vm376
        %v739 = vsel %vm737, 1, 0
        %v740 = vsel %vm738, 1, 0
        %v741 = vcvt.s32.f32 %v739
        %v742 = vcvt.s32.f32 %v740
        %746 = vrot.lane.b32.xlu0 %v732, 126
        %v747 = vpop.permute.xlu0 %746
        %748 = vrot.lane.b32.xlu0 %v733, 126
        %v749 = vpop.permute.xlu0 %748
        %750 = vrot.lane.b32.xlu0 %v734, 126
        %v751 = vpop.permute.xlu0 %750
        %vm752 = vcmask 1031168
        %v753 = vsel %vm752, %v747, %v749
        %v754 = vsel %vm752, %v749, %v751
        %v757 = vmul.f32 %v741, %v753
        %v758 = vmul.f32 %v742, %v754
        %v759 = vadd.f32 %v572, %v757
        %v760 = vadd.f32 %v573, %v758
        %s761 = sld [smem:[#allocation3 + $0x3]]
        %s762 = sld [smem:[#allocation3 + $0x34]]
        %v763 = vstv %s761
        %v764 = vstv %s762
        %v765 = vsel %vm219, %v763, %v764
        %v766 = vmul.f32 %v765, %v188
        %v767 = vmul.f32 %v765, %v184
        %v768 = vmul.f32 %v765, %v189
        %v769 = vadd.f32 %v766, 0.0
        %v770 = vadd.f32 %v767, 0.0
        %v771 = vadd.f32 %v768, 0.0
        %s772 = sld [smem:[#allocation3 + $0xa]]
        %s773 = sld [smem:[#allocation3 + $0x3b]]
        %v774 = vstv %s772
        %v775 = vstv %s773
        %v776 = vsel %vm219, %v774, %v775
        %v777 = vmul.f32 %v776, %v188
        %v778 = vmul.f32 %v776, %v184
        %v779 = vmul.f32 %v776, %v189
        %783 = vrot.lane.b32.xlu0 %v777, 112
        %v784 = vpop.permute.xlu0 %783
        %785 = vrot.lane.b32.xlu0 %v778, 112
        %v786 = vpop.permute.xlu0 %785
        %787 = vrot.lane.b32.xlu0 %v779, 112
        %v788 = vpop.permute.xlu0 %787
        %v789 = vsel %vm246, %v784, %v786
        %v790 = vsel %vm246, %v786, %v788
        %v794 = vadd.f32 %v769, %v789
        %v795 = vadd.f32 %v770, %v790
        %v796 = vadd.f32 %v771, %v788
        %s797 = sld [smem:[#allocation3 + $0x11]]
        %s798 = sld [smem:[#allocation3 + $0x42]]
        %v799 = vstv %s797
        %v800 = vstv %s798
        %v801 = vsel %vm219, %v799, %v800
        %v802 = vmul.f32 %v801, %v188
        %v803 = vmul.f32 %v801, %v184
        %v804 = vmul.f32 %v801, %v189
        %808 = vrot.lane.b32.xlu0 %v802, 96
        %v809 = vpop.permute.xlu0 %808
        %810 = vrot.lane.b32.xlu0 %v803, 96
        %v811 = vpop.permute.xlu0 %810
        %812 = vrot.lane.b32.xlu0 %v804, 96
        %v813 = vpop.permute.xlu0 %812
        %v814 = vsel %vm270, %v809, %v811
        %v815 = vsel %vm270, %v811, %v813
        %v819 = vadd.f32 %v794, %v814
        %v820 = vadd.f32 %v795, %v815
        %v821 = vadd.f32 %v796, %v813
        %s822 = sld [smem:[#allocation3 + $0x18]]
        %s823 = sld [smem:[#allocation3 + $0x49]]
        %v824 = vstv %s822
        %v825 = vstv %s823
        %v826 = vsel %vm219, %v824, %v825
        %v827 = vmul.f32 %v826, %v188
        %v828 = vmul.f32 %v826, %v184
        %v829 = vmul.f32 %v826, %v189
        %833 = vrot.lane.b32.xlu0 %v827, 80
        %v834 = vpop.permute.xlu0 %833
        %835 = vrot.lane.b32.xlu0 %v828, 80
        %v836 = vpop.permute.xlu0 %835
        %837 = vrot.lane.b32.xlu0 %v829, 80
        %v838 = vpop.permute.xlu0 %837
        %v839 = vsel %vm294, %v834, %v836
        %v840 = vsel %vm294, %v836, %v838
        %v844 = vadd.f32 %v819, %v839
        %v845 = vadd.f32 %v820, %v840
        %v846 = vadd.f32 %v821, %v838
        %s847 = sld [smem:[#allocation3 + $0x1f]]
        %s848 = sld [smem:[#allocation3 + $0x50]]
        %v849 = vstv %s847
        %v850 = vstv %s848
        %v851 = vsel %vm219, %v849, %v850
        %v852 = vmul.f32 %v851, %v188
        %v853 = vmul.f32 %v851, %v184
        %v854 = vmul.f32 %v851, %v189
        %858 = vrot.lane.b32.xlu0 %v852, 64
        %v859 = vpop.permute.xlu0 %858
        %860 = vrot.lane.b32.xlu0 %v853, 64
        %v861 = vpop.permute.xlu0 %860
        %862 = vrot.lane.b32.xlu0 %v854, 64
        %v863 = vpop.permute.xlu0 %862
        %v864 = vsel %vm318, %v859, %v861
        %v865 = vsel %vm318, %v861, %v863
        %v869 = vadd.f32 %v844, %v864
        %v870 = vadd.f32 %v845, %v865
        %v871 = vadd.f32 %v846, %v863
        %s872 = sld [smem:[#allocation3 + $0x26]]
        %s873 = sld [smem:[#allocation3 + $0x57]]
        %v874 = vstv %s872
        %v875 = vstv %s873
        %v876 = vsel %vm219, %v874, %v875
        %v877 = vmul.f32 %v876, %v188
        %v878 = vmul.f32 %v876, %v184
        %v879 = vmul.f32 %v876, %v189
        %883 = vrot.lane.b32.xlu0 %v877, 48
        %v884 = vpop.permute.xlu0 %883
        %885 = vrot.lane.b32.xlu0 %v878, 48
        %v886 = vpop.permute.xlu0 %885
        %887 = vrot.lane.b32.xlu0 %v879, 48
        %v888 = vpop.permute.xlu0 %887
        %v889 = vsel %vm342, %v884, %v886
        %v890 = vsel %vm342, %v886, %v888
        %v894 = vadd.f32 %v869, %v889
        %v895 = vadd.f32 %v870, %v890
        %v896 = vadd.f32 %v871, %v888
        %s897 = sld [smem:[#allocation3 + $0x2d]]
        %s898 = sld [smem:[#allocation3 + $0x5e]]
        %v899 = vstv %s897
        %v900 = vstv %s898
        %v901 = vsel %vm219, %v899, %v900
        %v902 = vmul.f32 %v901, %v188
        %v903 = vmul.f32 %v901, %v184
        %v904 = vmul.f32 %v901, %v189
        %908 = vrot.lane.b32.xlu0 %v902, 32
        %v909 = vpop.permute.xlu0 %908
        %910 = vrot.lane.b32.xlu0 %v903, 32
        %v911 = vpop.permute.xlu0 %910
        %912 = vrot.lane.b32.xlu0 %v904, 32
        %v913 = vpop.permute.xlu0 %912
        %v914 = vsel %vm366, %v909, %v911
        %v915 = vsel %vm366, %v911, %v913
        %v919 = vadd.f32 %v894, %v914
        %v920 = vadd.f32 %v895, %v915
        %v921 = vadd.f32 %v896, %v913
        %925 = vrot.lane.b32.xlu0 %v919, 125
        %v926 = vpop.permute.xlu0 %925
        %927 = vrot.lane.b32.xlu0 %v920, 125
        %v928 = vpop.permute.xlu0 %927
        %929 = vrot.lane.b32.xlu0 %v921, 125
        %v930 = vpop.permute.xlu0 %929
        %vm931 = vcmask 1022976
        %v932 = vsel %vm931, %v926, %v928
        %v933 = vsel %vm931, %v928, %v930
        %v936 = vadd.f32 %v759, %v932
        %v937 = vadd.f32 %v760, %v933
        %s938 = sld [smem:[#allocation3 + $0x4]]
        %s939 = sld [smem:[#allocation3 + $0x35]]
        %v940 = vstv %s938
        %v941 = vstv %s939
        %v942 = vsel %vm219, %v940, %v941
        %v943 = vmul.f32 %v942, %v188
        %v944 = vmul.f32 %v942, %v184
        %v945 = vmul.f32 %v942, %v189
        %v946 = vadd.f32 %v943, 0.0
        %v947 = vadd.f32 %v944, 0.0
        %v948 = vadd.f32 %v945, 0.0
        %s949 = sld [smem:[#allocation3 + $0xb]]
        %s950 = sld [smem:[#allocation3 + $0x3c]]
        %v951 = vstv %s949
        %v952 = vstv %s950
        %v953 = vsel %vm219, %v951, %v952
        %v954 = vmul.f32 %v953, %v188
        %v955 = vmul.f32 %v953, %v184
        %v956 = vmul.f32 %v953, %v189
        %960 = vrot.lane.b32.xlu0 %v954, 112
        %v961 = vpop.permute.xlu0 %960
        %962 = vrot.lane.b32.xlu0 %v955, 112
        %v963 = vpop.permute.xlu0 %962
        %964 = vrot.lane.b32.xlu0 %v956, 112
        %v965 = vpop.permute.xlu0 %964
        %v966 = vsel %vm246, %v961, %v963
        %v967 = vsel %vm246, %v963, %v965
        %v971 = vadd.f32 %v946, %v966
        %v972 = vadd.f32 %v947, %v967
        %v973 = vadd.f32 %v948, %v965
        %s974 = sld [smem:[#allocation3 + $0x12]]
        %s975 = sld [smem:[#allocation3 + $0x43]]
        %v976 = vstv %s974
        %v977 = vstv %s975
        %v978 = vsel %vm219, %v976, %v977
        %v979 = vmul.f32 %v978, %v188
        %v980 = vmul.f32 %v978, %v184
        %v981 = vmul.f32 %v978, %v189
        %985 = vrot.lane.b32.xlu0 %v979, 96
        %v986 = vpop.permute.xlu0 %985
        %987 = vrot.lane.b32.xlu0 %v980, 96
        %v988 = vpop.permute.xlu0 %987
        %989 = vrot.lane.b32.xlu0 %v981, 96
        %v990 = vpop.permute.xlu0 %989
        %v991 = vsel %vm270, %v986, %v988
        %v992 = vsel %vm270, %v988, %v990
        %v996 = vadd.f32 %v971, %v991
        %v997 = vadd.f32 %v972, %v992
        %v998 = vadd.f32 %v973, %v990
        %s999 = sld [smem:[#allocation3 + $0x19]]
        %s1000 = sld [smem:[#allocation3 + $0x4a]]
        %v1001 = vstv %s999
        %v1002 = vstv %s1000
        %v1003 = vsel %vm219, %v1001, %v1002
        %v1004 = vmul.f32 %v1003, %v188
        %v1005 = vmul.f32 %v1003, %v184
        %v1006 = vmul.f32 %v1003, %v189
        %1010 = vrot.lane.b32.xlu0 %v1004, 80
        %v1011 = vpop.permute.xlu0 %1010
        %1012 = vrot.lane.b32.xlu0 %v1005, 80
        %v1013 = vpop.permute.xlu0 %1012
        %1014 = vrot.lane.b32.xlu0 %v1006, 80
        %v1015 = vpop.permute.xlu0 %1014
        %v1016 = vsel %vm294, %v1011, %v1013
        %v1017 = vsel %vm294, %v1013, %v1015
        %v1021 = vadd.f32 %v996, %v1016
        %v1022 = vadd.f32 %v997, %v1017
        %v1023 = vadd.f32 %v998, %v1015
        %s1024 = sld [smem:[#allocation3 + $0x20]]
        %s1025 = sld [smem:[#allocation3 + $0x51]]
        %v1026 = vstv %s1024
        %v1027 = vstv %s1025
        %v1028 = vsel %vm219, %v1026, %v1027
        %v1029 = vmul.f32 %v1028, %v188
        %v1030 = vmul.f32 %v1028, %v184
        %v1031 = vmul.f32 %v1028, %v189
        %1035 = vrot.lane.b32.xlu0 %v1029, 64
        %v1036 = vpop.permute.xlu0 %1035
        %1037 = vrot.lane.b32.xlu0 %v1030, 64
        %v1038 = vpop.permute.xlu0 %1037
        %1039 = vrot.lane.b32.xlu0 %v1031, 64
        %v1040 = vpop.permute.xlu0 %1039
        %v1041 = vsel %vm318, %v1036, %v1038
        %v1042 = vsel %vm318, %v1038, %v1040
        %v1046 = vadd.f32 %v1021, %v1041
        %v1047 = vadd.f32 %v1022, %v1042
        %v1048 = vadd.f32 %v1023, %v1040
        %s1049 = sld [smem:[#allocation3 + $0x27]]
        %s1050 = sld [smem:[#allocation3 + $0x58]]
        %v1051 = vstv %s1049
        %v1052 = vstv %s1050
        %v1053 = vsel %vm219, %v1051, %v1052
        %v1054 = vmul.f32 %v1053, %v188
        %v1055 = vmul.f32 %v1053, %v184
        %v1056 = vmul.f32 %v1053, %v189
        %1060 = vrot.lane.b32.xlu0 %v1054, 48
        %v1061 = vpop.permute.xlu0 %1060
        %1062 = vrot.lane.b32.xlu0 %v1055, 48
        %v1063 = vpop.permute.xlu0 %1062
        %1064 = vrot.lane.b32.xlu0 %v1056, 48
        %v1065 = vpop.permute.xlu0 %1064
        %v1066 = vsel %vm342, %v1061, %v1063
        %v1067 = vsel %vm342, %v1063, %v1065
        %v1071 = vadd.f32 %v1046, %v1066
        %v1072 = vadd.f32 %v1047, %v1067
        %v1073 = vadd.f32 %v1048, %v1065
        %s1074 = sld [smem:[#allocation3 + $0x2e]]
        %s1075 = sld [smem:[#allocation3 + $0x5f]]
        %v1076 = vstv %s1074
        %v1077 = vstv %s1075
        %v1078 = vsel %vm219, %v1076, %v1077
        %v1079 = vmul.f32 %v1078, %v188
        %v1080 = vmul.f32 %v1078, %v184
        %v1081 = vmul.f32 %v1078, %v189
        %1085 = vrot.lane.b32.xlu0 %v1079, 32
        %v1086 = vpop.permute.xlu0 %1085
        %1087 = vrot.lane.b32.xlu0 %v1080, 32
        %v1088 = vpop.permute.xlu0 %1087
        %1089 = vrot.lane.b32.xlu0 %v1081, 32
        %v1090 = vpop.permute.xlu0 %1089
        %v1091 = vsel %vm366, %v1086, %v1088
        %v1092 = vsel %vm366, %v1088, %v1090
        %v1096 = vadd.f32 %v1071, %v1091
        %v1097 = vadd.f32 %v1072, %v1092
        %v1098 = vadd.f32 %v1073, %v1090
        %vm1099 = vcmp.ge.s32.totalorder %v215, 0
        %vm1100 = vcmp.ge.s32.totalorder %v216, 0
        %vm1101 = vcmp.lt.s32.totalorder %v215, 15
        %vm1102 = vcmp.lt.s32.totalorder %v216, 15
        %vm1103 = vmand %vm1099, %vm1101
        %vm1104 = vmand %vm1100, %vm1102
        %v1105 = vsel %vm1103, 1, 0
        %v1106 = vsel %vm1104, 1, 0
        %v1107 = vcvt.s32.f32 %v1105
        %v1108 = vcvt.s32.f32 %v1106
        %1112 = vrot.lane.b32.xlu0 %v1096, 124
        %v1113 = vpop.permute.xlu0 %1112
        %1114 = vrot.lane.b32.xlu0 %v1097, 124
        %v1115 = vpop.permute.xlu0 %1114
        %1116 = vrot.lane.b32.xlu0 %v1098, 124
        %v1117 = vpop.permute.xlu0 %1116
        %vm1118 = vcmask 1014784
        %v1119 = vsel %vm1118, %v1113, %v1115
        %v1120 = vsel %vm1118, %v1115, %v1117
        %v1123 = vmul.f32 %v1107, %v1119
        %v1124 = vmul.f32 %v1108, %v1120
        %v1125 = vadd.f32 %v936, %v1123
        %v1126 = vadd.f32 %v937, %v1124
        %s1127 = sld [smem:[#allocation3 + $0x5]]
        %s1128 = sld [smem:[#allocation3 + $0x36]]
        %v1129 = vstv %s1127
        %v1130 = vstv %s1128
        %v1131 = vsel %vm219, %v1129, %v1130
        %v1132 = vmul.f32 %v1131, %v188
        %v1133 = vmul.f32 %v1131, %v184
        %v1134 = vmul.f32 %v1131, %v189
        %v1135 = vadd.f32 %v1132, 0.0
        %v1136 = vadd.f32 %v1133, 0.0
        %v1137 = vadd.f32 %v1134, 0.0
        %s1138 = sld [smem:[#allocation3 + $0xc]]
        %s1139 = sld [smem:[#allocation3 + $0x3d]]
        %v1140 = vstv %s1138
        %v1141 = vstv %s1139
        %v1142 = vsel %vm219, %v1140, %v1141
        %v1143 = vmul.f32 %v1142, %v188
        %v1144 = vmul.f32 %v1142, %v184
        %v1145 = vmul.f32 %v1142, %v189
        %1149 = vrot.lane.b32.xlu0 %v1143, 112
        %v1150 = vpop.permute.xlu0 %1149
        %1151 = vrot.lane.b32.xlu0 %v1144, 112
        %v1152 = vpop.permute.xlu0 %1151
        %1153 = vrot.lane.b32.xlu0 %v1145, 112
        %v1154 = vpop.permute.xlu0 %1153
        %v1155 = vsel %vm246, %v1150, %v1152
        %v1156 = vsel %vm246, %v1152, %v1154
        %v1160 = vadd.f32 %v1135, %v1155
        %v1161 = vadd.f32 %v1136, %v1156
        %v1162 = vadd.f32 %v1137, %v1154
        %s1163 = sld [smem:[#allocation3 + $0x13]]
        %s1164 = sld [smem:[#allocation3 + $0x44]]
        %v1165 = vstv %s1163
        %v1166 = vstv %s1164
        %v1167 = vsel %vm219, %v1165, %v1166
        %v1168 = vmul.f32 %v1167, %v188
        %v1169 = vmul.f32 %v1167, %v184
        %v1170 = vmul.f32 %v1167, %v189
        %1174 = vrot.lane.b32.xlu0 %v1168, 96
        %v1175 = vpop.permute.xlu0 %1174
        %1176 = vrot.lane.b32.xlu0 %v1169, 96
        %v1177 = vpop.permute.xlu0 %1176
        %1178 = vrot.lane.b32.xlu0 %v1170, 96
        %v1179 = vpop.permute.xlu0 %1178
        %v1180 = vsel %vm270, %v1175, %v1177
        %v1181 = vsel %vm270, %v1177, %v1179
        %v1185 = vadd.f32 %v1160, %v1180
        %v1186 = vadd.f32 %v1161, %v1181
        %v1187 = vadd.f32 %v1162, %v1179
        %s1188 = sld [smem:[#allocation3 + $0x1a]]
        %s1189 = sld [smem:[#allocation3 + $0x4b]]
        %v1190 = vstv %s1188
        %v1191 = vstv %s1189
        %v1192 = vsel %vm219, %v1190, %v1191
        %v1193 = vmul.f32 %v1192, %v188
        %v1194 = vmul.f32 %v1192, %v184
        %v1195 = vmul.f32 %v1192, %v189
        %1199 = vrot.lane.b32.xlu0 %v1193, 80
        %v1200 = vpop.permute.xlu0 %1199
        %1201 = vrot.lane.b32.xlu0 %v1194, 80
        %v1202 = vpop.permute.xlu0 %1201
        %1203 = vrot.lane.b32.xlu0 %v1195, 80
        %v1204 = vpop.permute.xlu0 %1203
        %v1205 = vsel %vm294, %v1200, %v1202
        %v1206 = vsel %vm294, %v1202, %v1204
        %v1210 = vadd.f32 %v1185, %v1205
        %v1211 = vadd.f32 %v1186, %v1206
        %v1212 = vadd.f32 %v1187, %v1204
        %s1213 = sld [smem:[#allocation3 + $0x21]]
        %s1214 = sld [smem:[#allocation3 + $0x52]]
        %v1215 = vstv %s1213
        %v1216 = vstv %s1214
        %v1217 = vsel %vm219, %v1215, %v1216
        %v1218 = vmul.f32 %v1217, %v188
        %v1219 = vmul.f32 %v1217, %v184
        %v1220 = vmul.f32 %v1217, %v189
        %1224 = vrot.lane.b32.xlu0 %v1218, 64
        %v1225 = vpop.permute.xlu0 %1224
        %1226 = vrot.lane.b32.xlu0 %v1219, 64
        %v1227 = vpop.permute.xlu0 %1226
        %1228 = vrot.lane.b32.xlu0 %v1220, 64
        %v1229 = vpop.permute.xlu0 %1228
        %v1230 = vsel %vm318, %v1225, %v1227
        %v1231 = vsel %vm318, %v1227, %v1229
        %v1235 = vadd.f32 %v1210, %v1230
        %v1236 = vadd.f32 %v1211, %v1231
        %v1237 = vadd.f32 %v1212, %v1229
        %s1238 = sld [smem:[#allocation3 + $0x28]]
        %s1239 = sld [smem:[#allocation3 + $0x59]]
        %v1240 = vstv %s1238
        %v1241 = vstv %s1239
        %v1242 = vsel %vm219, %v1240, %v1241
        %v1243 = vmul.f32 %v1242, %v188
        %v1244 = vmul.f32 %v1242, %v184
        %v1245 = vmul.f32 %v1242, %v189
        %1249 = vrot.lane.b32.xlu0 %v1243, 48
        %v1250 = vpop.permute.xlu0 %1249
        %1251 = vrot.lane.b32.xlu0 %v1244, 48
        %v1252 = vpop.permute.xlu0 %1251
        %1253 = vrot.lane.b32.xlu0 %v1245, 48
        %v1254 = vpop.permute.xlu0 %1253
        %v1255 = vsel %vm342, %v1250, %v1252
        %v1256 = vsel %vm342, %v1252, %v1254
        %v1260 = vadd.f32 %v1235, %v1255
        %v1261 = vadd.f32 %v1236, %v1256
        %v1262 = vadd.f32 %v1237, %v1254
        %s1263 = sld [smem:[#allocation3 + $0x2f]]
        %s1264 = sld [smem:[#allocation3 + $0x60]]
        %v1265 = vstv %s1263
        %v1266 = vstv %s1264
        %v1267 = vsel %vm219, %v1265, %v1266
        %v1268 = vmul.f32 %v1267, %v188
        %v1269 = vmul.f32 %v1267, %v184
        %v1270 = vmul.f32 %v1267, %v189
        %1274 = vrot.lane.b32.xlu0 %v1268, 32
        %v1275 = vpop.permute.xlu0 %1274
        %1276 = vrot.lane.b32.xlu0 %v1269, 32
        %v1277 = vpop.permute.xlu0 %1276
        %1278 = vrot.lane.b32.xlu0 %v1270, 32
        %v1279 = vpop.permute.xlu0 %1278
        %v1280 = vsel %vm366, %v1275, %v1277
        %v1281 = vsel %vm366, %v1277, %v1279
        %v1285 = vadd.f32 %v1260, %v1280
        %v1286 = vadd.f32 %v1261, %v1281
        %v1287 = vadd.f32 %v1262, %v1279
        %vm1288 = vcmp.lt.s32.totalorder %v215, 14
        %vm1289 = vcmp.lt.s32.totalorder %v216, 14
        %vm1290 = vmand %vm1099, %vm1288
        %vm1291 = vmand %vm1100, %vm1289
        %v1292 = vsel %vm1290, 1, 0
        %v1293 = vsel %vm1291, 1, 0
        %v1294 = vcvt.s32.f32 %v1292
        %v1295 = vcvt.s32.f32 %v1293
        %1299 = vrot.lane.b32.xlu0 %v1285, 123
        %v1300 = vpop.permute.xlu0 %1299
        %1301 = vrot.lane.b32.xlu0 %v1286, 123
        %v1302 = vpop.permute.xlu0 %1301
        %1303 = vrot.lane.b32.xlu0 %v1287, 123
        %v1304 = vpop.permute.xlu0 %1303
        %vm1305 = vcmask 1006592
        %v1306 = vsel %vm1305, %v1300, %v1302
        %v1307 = vsel %vm1305, %v1302, %v1304
        %v1310 = vmul.f32 %v1294, %v1306
        %v1311 = vmul.f32 %v1295, %v1307
        %v1312 = vadd.f32 %v1125, %v1310
        %v1313 = vadd.f32 %v1126, %v1311
        %s1314 = sld [smem:[#allocation3 + $0x6]]
        %s1315 = sld [smem:[#allocation3 + $0x37]]
        %v1316 = vstv %s1314
        %v1317 = vstv %s1315
        %v1318 = vsel %vm219, %v1316, %v1317
        %v1319 = vmul.f32 %v1318, %v188
        %v1320 = vmul.f32 %v1318, %v184
        %v1321 = vmul.f32 %v1318, %v189
        %v1322 = vadd.f32 %v1319, 0.0
        %v1323 = vadd.f32 %v1320, 0.0
        %v1324 = vadd.f32 %v1321, 0.0
        %s1325 = sld [smem:[#allocation3 + $0xd]]
        %s1326 = sld [smem:[#allocation3 + $0x3e]]
        %v1327 = vstv %s1325
        %v1328 = vstv %s1326
        %v1329 = vsel %vm219, %v1327, %v1328
        %v1330 = vmul.f32 %v1329, %v188
        %v1331 = vmul.f32 %v1329, %v184
        %v1332 = vmul.f32 %v1329, %v189
        %1336 = vrot.lane.b32.xlu0 %v1330, 112
        %v1337 = vpop.permute.xlu0 %1336
        %1338 = vrot.lane.b32.xlu0 %v1331, 112
        %v1339 = vpop.permute.xlu0 %1338
        %1340 = vrot.lane.b32.xlu0 %v1332, 112
        %v1341 = vpop.permute.xlu0 %1340
        %v1342 = vsel %vm246, %v1337, %v1339
        %v1343 = vsel %vm246, %v1339, %v1341
        %v1347 = vadd.f32 %v1322, %v1342
        %v1348 = vadd.f32 %v1323, %v1343
        %v1349 = vadd.f32 %v1324, %v1341
        %s1350 = sld [smem:[#allocation3 + $0x14]]
        %s1351 = sld [smem:[#allocation3 + $0x45]]
        %v1352 = vstv %s1350
        %v1353 = vstv %s1351
        %v1354 = vsel %vm219, %v1352, %v1353
        %v1355 = vmul.f32 %v1354, %v188
        %v1356 = vmul.f32 %v1354, %v184
        %v1357 = vmul.f32 %v1354, %v189
        %1361 = vrot.lane.b32.xlu0 %v1355, 96
        %v1362 = vpop.permute.xlu0 %1361
        %1363 = vrot.lane.b32.xlu0 %v1356, 96
        %v1364 = vpop.permute.xlu0 %1363
        %1365 = vrot.lane.b32.xlu0 %v1357, 96
        %v1366 = vpop.permute.xlu0 %1365
        %v1367 = vsel %vm270, %v1362, %v1364
        %v1368 = vsel %vm270, %v1364, %v1366
        %v1372 = vadd.f32 %v1347, %v1367
        %v1373 = vadd.f32 %v1348, %v1368
        %v1374 = vadd.f32 %v1349, %v1366
        %s1375 = sld [smem:[#allocation3 + $0x1b]]
        %s1376 = sld [smem:[#allocation3 + $0x4c]]
        %v1377 = vstv %s1375
        %v1378 = vstv %s1376
        %v1379 = vsel %vm219, %v1377, %v1378
        %v1380 = vmul.f32 %v1379, %v188
        %v1381 = vmul.f32 %v1379, %v184
        %v1382 = vmul.f32 %v1379, %v189
        %1386 = vrot.lane.b32.xlu0 %v1380, 80
        %v1387 = vpop.permute.xlu0 %1386
        %1388 = vrot.lane.b32.xlu0 %v1381, 80
        %v1389 = vpop.permute.xlu0 %1388
        %1390 = vrot.lane.b32.xlu0 %v1382, 80
        %v1391 = vpop.permute.xlu0 %1390
        %v1392 = vsel %vm294, %v1387, %v1389
        %v1393 = vsel %vm294, %v1389, %v1391
        %v1397 = vadd.f32 %v1372, %v1392
        %v1398 = vadd.f32 %v1373, %v1393
        %v1399 = vadd.f32 %v1374, %v1391
        %s1400 = sld [smem:[#allocation3 + $0x22]]
        %s1401 = sld [smem:[#allocation3 + $0x53]]
        %v1402 = vstv %s1400
        %v1403 = vstv %s1401
        %v1404 = vsel %vm219, %v1402, %v1403
        %v1405 = vmul.f32 %v1404, %v188
        %v1406 = vmul.f32 %v1404, %v184
        %v1407 = vmul.f32 %v1404, %v189
        %1411 = vrot.lane.b32.xlu0 %v1405, 64
        %v1412 = vpop.permute.xlu0 %1411
        %1413 = vrot.lane.b32.xlu0 %v1406, 64
        %v1414 = vpop.permute.xlu0 %1413
        %1415 = vrot.lane.b32.xlu0 %v1407, 64
        %v1416 = vpop.permute.xlu0 %1415
        %v1417 = vsel %vm318, %v1412, %v1414
        %v1418 = vsel %vm318, %v1414, %v1416
        %v1422 = vadd.f32 %v1397, %v1417
        %v1423 = vadd.f32 %v1398, %v1418
        %v1424 = vadd.f32 %v1399, %v1416
        %s1425 = sld [smem:[#allocation3 + $0x29]]
        %s1426 = sld [smem:[#allocation3 + $0x5a]]
        %v1427 = vstv %s1425
        %v1428 = vstv %s1426
        %v1429 = vsel %vm219, %v1427, %v1428
        %v1430 = vmul.f32 %v1429, %v188
        %v1431 = vmul.f32 %v1429, %v184
        %v1432 = vmul.f32 %v1429, %v189
        %1436 = vrot.lane.b32.xlu0 %v1430, 48
        %v1437 = vpop.permute.xlu0 %1436
        %1438 = vrot.lane.b32.xlu0 %v1431, 48
        %v1439 = vpop.permute.xlu0 %1438
        %1440 = vrot.lane.b32.xlu0 %v1432, 48
        %v1441 = vpop.permute.xlu0 %1440
        %v1442 = vsel %vm342, %v1437, %v1439
        %v1443 = vsel %vm342, %v1439, %v1441
        %v1447 = vadd.f32 %v1422, %v1442
        %v1448 = vadd.f32 %v1423, %v1443
        %v1449 = vadd.f32 %v1424, %v1441
        %s1450 = sld [smem:[#allocation3 + $0x30]]
        %s1451 = sld [smem:[#allocation3 + $0x61]]
        %v1452 = vstv %s1450
        %v1453 = vstv %s1451
        %v1454 = vsel %vm219, %v1452, %v1453
        %v1455 = vmul.f32 %v1454, %v188
        %v1456 = vmul.f32 %v1454, %v184
        %v1457 = vmul.f32 %v1454, %v189
        %1461 = vrot.lane.b32.xlu0 %v1455, 32
        %v1462 = vpop.permute.xlu0 %1461
        %1463 = vrot.lane.b32.xlu0 %v1456, 32
        %v1464 = vpop.permute.xlu0 %1463
        %1465 = vrot.lane.b32.xlu0 %v1457, 32
        %v1466 = vpop.permute.xlu0 %1465
        %v1467 = vsel %vm366, %v1462, %v1464
        %v1468 = vsel %vm366, %v1464, %v1466
        %v1472 = vadd.f32 %v1447, %v1467
        %v1473 = vadd.f32 %v1448, %v1468
        %v1474 = vadd.f32 %v1449, %v1466
        %vm1475 = vcmp.lt.s32.totalorder %v215, 13
        %vm1476 = vcmp.lt.s32.totalorder %v216, 13
        %vm1477 = vmand %vm1099, %vm1475
        %vm1478 = vmand %vm1100, %vm1476
        %v1479 = vsel %vm1477, 1, 0
        %v1480 = vsel %vm1478, 1, 0
        %v1481 = vcvt.s32.f32 %v1479
        %v1482 = vcvt.s32.f32 %v1480
        %1486 = vrot.lane.b32.xlu0 %v1472, 122
        %v1487 = vpop.permute.xlu0 %1486
        %1488 = vrot.lane.b32.xlu0 %v1473, 122
        %v1489 = vpop.permute.xlu0 %1488
        %1490 = vrot.lane.b32.xlu0 %v1474, 122
        %v1491 = vpop.permute.xlu0 %1490
        %vm1492 = vcmask 998400
        %v1493 = vsel %vm1492, %v1487, %v1489
        %v1494 = vsel %vm1492, %v1489, %v1491
        %v1497 = vmul.f32 %v1481, %v1493
        %v1498 = vmul.f32 %v1482, %v1494
        %v1499 = vadd.f32 %v1312, %v1497
        %v1500 = vadd.f32 %v1313, %v1498
        %v1503 = vrot.slane %v1499, 1
        %v1504 = vrot.slane %v1500, 1
        %v1507 = vadd.f32 %v1499, %v1503
        %v1508 = vadd.f32 %v1500, %v1504
        %v1509 = vxor.u32 %v1507, 2147483648
        %v1510 = vxor.u32 %v1508, 2147483648
        %v1511 = vmul.f32 %v1509, 1.442695
        %v1512 = vpow.pop %v1511
        %v1513 = vmul.f32 %v1510, 1.442695
        %v1514 = vpow.pop %v1513
        %v1515 = vadd.f32 %v1512, 1.0
        %v1516 = vadd.f32 %v1514, 1.0
        %v1517 = vrcp.pop %v1515
        %v1518 = vmul.f32 1.0, %v1517
        %v1519 = vrcp.pop %v1516
        %v1520 = vmul.f32 1.0, %v1519
        %v1521 = vlaneseq
        %v1522 = vshrl.u32 %v1521, 7
        %v1523 = vsub.s32 0, %v1522
        %v1524 = vrot.slane %v1518, %v1523
        %v1525 = vlaneseq
        %v1526 = vshrl.u32 %v1525, 7
        %v1527 = vsub.s32 0, %v1526
        %v1528 = vrot.slane %v1520, %v1527
        %v1531 = vcombine.low %v1524, %v1528
        %v1533 = vmul.f32 %v138, %v1531
        %1534 = vst [vmem:[%s137] sm:$0xff] %v1533
        %s1535 = sand.u32 %s57, 1
        %s1536 = scalar_lea.sflag [#allocation6], %s1535
        %s1537 = sand.u32 %s57, 1
        %s1538 = smul.addr %s1537, 8
        %s1539 = scalar_lea.vmem [#allocation7], %s1538
        // Predicated region
        $region29: #{tpu_custom_call.1} parent=23 // pred_check
          %p1540 = pneg %p67
        $region30: #{tpu_custom_call.1} parent=23 // pred_check_branch
          %1542 = sbr.rel (%p1540) target = $region32
        $region31: #{tpu_custom_call.1} parent=23 // pred_region
          %s1544 = ssub.s32 128, 128
          %1545 = vsyncadd %s1536, %s1544
          %s1546 = smul.addr %s23, 2
          %s1547 = smul.addr %s1546, 64
          %s1548 = scalar_lea.hbm %s2, %s1547
          %s1550 = sshll.u32 %s1539, 4
          %s1551 = int_to_ptr.vmem [resolvable:$true] %s1550
          %1553 = dma.vmem_to_hbm [thread:$0]  %s1551, 128, %s1548, %s1536
        $region32: #{tpu_custom_call.1} parent=23 // pred_fallthru
          _
      $region24: #{tpu_custom_call.1} parent=5 // pred_fallthru
        _
      %p1554 = scmp.le.s32.totalorder 2, %s18
      // Predicated region
      $region33: #{tpu_custom_call.1} parent=5 // pred_check
        %p1555 = pneg %p1554
      $region34: #{tpu_custom_call.1} parent=5 // pred_check_branch
        %1557 = sbr.rel (%p1555) target = $region36
      $region35: #{tpu_custom_call.1} parent=5 // pred_region
        %s1558 = ssub.s32 %s18, 2
        // Predicated region
        $region37: #{tpu_custom_call.1} parent=35 // pred_check
          %p1559 = pneg %p73
        $region38: #{tpu_custom_call.1} parent=35 // pred_check_branch
          %1561 = sbr.rel (%p1559) target = $region40
        $region39: #{tpu_custom_call.1} parent=35 // pred_region
          %s1562 = sand.u32 %s58, 1
          %s1563 = scalar_lea.sflag [#allocation6], %s1562
          %s1564 = sand.u32 %s58, 1
          %s1565 = smul.addr %s1564, 8
          %s1566 = scalar_lea.vmem [#allocation7], %s1565
          %1567 = dma.done %s1563, 128
        $region40: #{tpu_custom_call.1} parent=35 // pred_fallthru
          _
      $region36: #{tpu_custom_call.1} parent=5 // pred_fallthru
        _
    $region6: #{tpu_custom_call.1} parent=1 // loop_footer
      %s22 = sadd.s32 1, %s18
    $region7: #{tpu_custom_call.1} parent=1 // loop_footer_branch
      %17 = sbr.rel target = $region3
    $region8: #{tpu_custom_call.1} parent=1 // loop_exit
      _
    %1568 = vsyncpa [#allocation5], 1
    %s1569 = scalar_lea.sflag [#allocation5], 1
    %1570 = vsyncpa %s1569, 1
    %1571 = vsyncpa [#allocation6], 1
    %s1572 = scalar_lea.sflag [#allocation6], 1
    %1573 = vsyncpa %s1572, 1

</llo_original>
